<compile_context>
chip_gen: v5e
topology: v5e:2x2
jax: 0.10.0
libtpu: 0.0.40
codegen_flags: <defaults>
</compile_context>

<pallas_src>
import functools

import jax
import jax.numpy as jnp
from jax import lax
from jax.experimental import pallas as pl
from jax.experimental.pallas import tpu as pltpu


def _round_up(x, m):
    return ((x + m - 1) // m) * m


# ---------------------------------------------------------------------------
# Fused kernel: one (episode b, query-tile q) step.
#   inputs : s_ref (1, N*K, Din), q_ref (1, TQ, Din), w_ref (Din, H), b_ref (1, H)
#   outputs: logits slab (1, TQ, lanes_pad), support emb (1, N*K, H),
#            proto (1, N, H), query emb (1, TQ, H)
#   scratch: proto_pad (lanes_pad, H), pnrm (1, lanes_pad)
# ---------------------------------------------------------------------------
def _fused_proto_kernel(s_ref, q_ref, w_ref, b_ref,
                        logits_ref, sup_ref, proto_ref, qemb_ref,
                        proto_pad_ref, pnrm_ref, *, n_cls, k_shot):
    w = w_ref[...]                          # (Din, H) resident
    bias = b_ref[...]                       # (1, H)   resident
    lanes_pad = proto_pad_ref.shape[0]      # multiple of 128

    # ---- once per episode: encode support, prototypes, ||p||^2 -------------
    @pl.when(pl.program_id(1) == 0)
    def _():
        s2 = s_ref[0]                                             # (N*K, Din)
        sup = jnp.dot(s2, w, preferred_element_type=jnp.float32) + bias
        sup_ref[...] = sup[None]                                  # (1, N*K, H)

        # Class-averaging matrix (lanes_pad, N*K): row i sums the K shots of
        # class i; rows >= N are all zero.  Keeps the prototypes in a 128-row
        # slab so the distance matmul below is lane-dense and no in-kernel
        # reshapes are needed.
        nk = s2.shape[0]
        row = lax.broadcasted_iota(jnp.int32, (lanes_pad, nk), 0)
        col = lax.broadcasted_iota(jnp.int32, (lanes_pad, nk), 1)
        in_class = (col >= row * k_shot) & (col < (row + 1) * k_shot)
        sum_m = in_class.astype(jnp.float32)
        proto_pad = jnp.dot(sum_m, sup,
                            preferred_element_type=jnp.float32,
                            precision=lax.Precision.HIGHEST) * (1.0 / k_shot)
        proto_pad_ref[...] = proto_pad                            # (lanes_pad, H)
        proto_ref[...] = proto_pad[0:n_cls][None]                 # (1, N, H)

        # ||p||^2 directly in row (lane) orientation via a ones-vector matmul
        # (avoids a sublane->lane transpose); once per episode, tiny.
        ones_h = jnp.ones((1, proto_pad.shape[1]), jnp.float32)
        pnrm_ref[...] = lax.dot_general(
            ones_h, proto_pad * proto_pad, (((1,), (1,)), ((), ())),
            preferred_element_type=jnp.float32,
            precision=lax.Precision.HIGHEST)                      # (1, lanes_pad)

    # ---- every (episode, query tile): encode queries + distances -----------
    q2 = q_ref[0]                                                 # (TQ, Din)
    qe = jnp.dot(q2, w, preferred_element_type=jnp.float32) + bias
    qemb_ref[...] = qe[None]                                      # (1, TQ, H)

    # -||q - p||^2 = 2 q.p - ||q||^2 - ||p||^2 ; cross term on the MXU (fp32).
    proto_pad = proto_pad_ref[...]                                # (lanes_pad, H)
    cross = lax.dot_general(qe, proto_pad, (((1,), (1,)), ((), ())),
                            preferred_element_type=jnp.float32,
                            precision=lax.Precision.HIGHEST)      # (TQ, lanes_pad)
    q_nrm = jnp.sum(qe * qe, axis=-1, keepdims=True)              # (TQ, 1)
    raw = 2.0 * cross - q_nrm - pnrm_ref[...]                     # (TQ, lanes_pad)

    lane = lax.broadcasted_iota(jnp.int32, raw.shape, 1)
    valid = lane < n_cls
    mx = jnp.max(jnp.where(valid, raw, -jnp.inf), axis=-1, keepdims=True)
    min1 = jnp.min(jnp.where(valid, raw, jnp.inf), axis=-1, keepdims=True) - 1.0
    # First-max over the N real classes (the appended min-1 column can never
    # win), matching torch.max tie-breaking.
    pred_f = jnp.min(jnp.where(valid & (raw == mx), lane, n_cls),
                     axis=-1, keepdims=True).astype(jnp.float32)  # (TQ, 1)

    # One lane-dense unmasked store: lanes [0,N) logits, lane N = min-1,
    # lane N+1 = argmax (as f32), remaining lanes = min-1 filler.
    out = jnp.where(valid, raw, min1)
    out = jnp.where(lane == n_cls + 1, pred_f, out)
    logits_ref[...] = out[None]


# ---------------------------------------------------------------------------
# Wrapper: mirrors Proto.forward -> (logits, pred, support, support_proto, query)
# The sentence encoder is modelled as a single Linear (enc_w, enc_b).
# ---------------------------------------------------------------------------
def proto_forward(s_raw, q_raw, enc_w, enc_b, N, K, total_Q, *, tile_q=512):
    Din = s_raw.shape[-1]
    H = enc_w.shape[1]
    NK = N * K
    B = s_raw.shape[0] // NK
    lanes_pad = _round_up(N + 2, 128)      # N logits + min-1 + pred, lane-dense

    support_in = s_raw.reshape(B, NK, Din)     # metadata reshape (no copy)
    query_in = q_raw.reshape(B, total_Q, Din)

    # --- choose the query tile under an explicit VMEM budget ----------------
    def est_vmem(tq):
        return 4 * (2 * NK * Din + 2 * tq * Din        # raw inputs (x2 buffers)
                    + 2 * (Din * H + H)                # resident weight + bias
                    + 2 * tq * lanes_pad               # logits slab
                    + 2 * NK * H + 2 * N * H + 2 * tq * H   # embedding outputs
                    + lanes_pad * H + 8 * lanes_pad)   # scratch

    budget = 40 * 1024 * 1024              # headroom under v7x's 64 MiB VMEM
    tile_q = max(8, min(_round_up(tile_q, 8), _round_up(total_Q, 8)))
    while tile_q > 8 and est_vmem(tile_q) > budget:
        tile_q = max(8, _round_up(tile_q // 2, 8))
    vmem_limit = int(min(max(2 * est_vmem(tile_q), 32 * 1024 * 1024),
                         60 * 1024 * 1024))

    tq_pad = _round_up(total_Q, tile_q)
    if tq_pad != total_Q:
        query_in = jnp.pad(query_in, ((0, 0), (0, tq_pad - total_Q), (0, 0)))
    n_qt = tq_pad // tile_q

    cost = pl.CostEstimate(
        flops=(2 * B * (NK + tq_pad) * Din * H            # encoder
               + 2 * B * lanes_pad * NK * H               # prototypes
               + 2 * B * tq_pad * lanes_pad * H),         # distance cross term
        transcendentals=0,
        bytes_accessed=4 * (B * (NK + tq_pad) * Din + Din * H + H
                            + B * tq_pad * lanes_pad
                            + B * (NK + N + tq_pad) * H),
    )

    logits_pad, sup_flat, support_proto, query_emb = pl.pallas_call(
        functools.partial(_fused_proto_kernel, n_cls=N, k_shot=K),
        out_shape=(
            jax.ShapeDtypeStruct((B, tq_pad, lanes_pad), jnp.float32),
            jax.ShapeDtypeStruct((B, NK, H), jnp.float32),
            jax.ShapeDtypeStruct((B, N, H), jnp.float32),
            jax.ShapeDtypeStruct((B, tq_pad, H), jnp.float32),
        ),
        grid=(B, n_qt),
        in_specs=[
            pl.BlockSpec((1, NK, Din), lambda b, q: (b, 0, 0)),
            pl.BlockSpec((1, tile_q, Din), lambda b, q: (b, q, 0)),
            pl.BlockSpec((Din, H), lambda b, q: (0, 0)),    # resident weight
            pl.BlockSpec((1, H), lambda b, q: (0, 0)),      # resident bias
        ],
        out_specs=(
            pl.BlockSpec((1, tile_q, lanes_pad), lambda b, q: (b, q, 0)),
            pl.BlockSpec((1, NK, H), lambda b, q: (b, 0, 0)),
            pl.BlockSpec((1, N, H), lambda b, q: (b, 0, 0)),
            pl.BlockSpec((1, tile_q, H), lambda b, q: (b, q, 0)),
        ),
        scratch_shapes=[
            pltpu.VMEM((lanes_pad, H), jnp.float32),    # padded prototypes
            pltpu.VMEM((1, lanes_pad), jnp.float32),    # ||proto||^2 row
        ],
        compiler_params=pltpu.CompilerParams(
            dimension_semantics=("parallel", "arbitrary"),
            vmem_limit_bytes=vmem_limit),
        cost_estimate=cost,
    )(support_in, query_in, enc_w, enc_b)

    logits = logits_pad[:, :total_Q, :N + 1]                    # (B, total_Q, N+1)
    pred = logits_pad[:, :total_Q, N + 1].astype(jnp.int32).reshape(-1)
    support = sup_flat.reshape(B, N, K, H)                      # (B, N, K, H)
    query = query_emb[:, :total_Q]                              # (B, total_Q, H)
    return logits, pred, support, support_proto, query


# ---------------------------------------------------------------------------
# Pure-JAX reference (exact PyTorch math) for the correctness check
# ---------------------------------------------------------------------------
def _reference(s_raw, q_raw, enc_w, enc_b, N, K, total_Q):
    H = enc_w.shape[1]
    se = s_raw @ enc_w + enc_b
    qe = q_raw @ enc_w + enc_b
    sup = se.reshape(-1, N, K, H)
    qry = qe.reshape(-1, total_Q, H)
    proto = sup.mean(2)
    diff = proto[:, None, :, :] - qry[:, :, None, :]
    logits = -jnp.sum(diff * diff, axis=-1)
    minn = jnp.min(logits, axis=-1, keepdims=True) - 1.0
    logits = jnp.concatenate([logits, minn], axis=-1)
    pred = jnp.argmax(logits.reshape(-1, N + 1), axis=-1)
    return logits, pred, sup, proto, qry


if __name__ == "__main__":
    # B=2 episodes, N=4 classes, K=4 shots, Q=2 queries/class -> total_Q=8,
    # encoder D_in=16, hidden H=32
    B, N, K, Q, D_IN, H = 2, 4, 4, 2, 16, 32
    total_Q = N * Q

    key = jax.random.PRNGKey(0)
    k_s, k_q, k_w, k_b = jax.random.split(key, 4)
    s_raw = jax.random.normal(k_s, (B * N * K, D_IN), dtype=jnp.float32)
    q_raw = jax.random.normal(k_q, (B * total_Q, D_IN), dtype=jnp.float32)
    enc_w = jax.random.normal(k_w, (D_IN, H), dtype=jnp.float32) * 0.1
    enc_b = jax.random.normal(k_b, (1, H), dtype=jnp.float32) * 0.1

    logits, pred, support, support_proto, query = jax.block_until_ready(
        proto_forward(s_raw, q_raw, enc_w, enc_b, N, K, total_Q)
    )

    ref_logits, ref_pred, ref_sup, ref_proto, ref_q = _reference(
        s_raw, q_raw, enc_w, enc_b, N, K, total_Q
    )
    assert logits.shape == (B, total_Q, N + 1)
    assert pred.shape == (B * total_Q,)
    # Encoder runs at DEFAULT MXU precision and the distance identity has fp32
    # cancellation -> compare at 1e-4.
    assert jnp.allclose(logits, ref_logits, rtol=1e-4, atol=1e-4)
    assert jnp.allclose(support_proto, ref_proto, rtol=1e-4, atol=1e-4)
    assert jnp.allclose(support, ref_sup, rtol=1e-4, atol=1e-4)
    assert jnp.allclose(query, ref_q, rtol=1e-4, atol=1e-4)
    assert jnp.all(pred == ref_pred.astype(jnp.int32))

    print("KERNEL_OK")
</pallas_src>

<mosaic_0001>
module attributes {stable_mosaic.version = 11 : i64} {
  func.func @_fused_proto_kernel(%arg0: i32, %arg1: i32, %arg2: memref<1x16x16xf32, #tpu.memory_space<vmem>>, %arg3: memref<1x8x16xf32, #tpu.memory_space<vmem>>, %arg4: memref<16x32xf32, #tpu.memory_space<vmem>>, %arg5: memref<1x32xf32, #tpu.memory_space<vmem>>, %arg6: memref<1x8x128xf32, #tpu.memory_space<vmem>>, %arg7: memref<1x16x32xf32, #tpu.memory_space<vmem>>, %arg8: memref<1x4x32xf32, #tpu.memory_space<vmem>>, %arg9: memref<1x8x32xf32, #tpu.memory_space<vmem>>, %arg10: memref<128x32xf32, #tpu.memory_space<vmem>>, %arg11: memref<1x128xf32, #tpu.memory_space<vmem>>) attributes {dimension_semantics = [#tpu.dimension_semantics<parallel>, #tpu.dimension_semantics<arbitrary>], iteration_bounds = array<i64: 2, 1>, scalar_prefetch = 0 : i64, scratch_operands = 2 : i64, tpu.core_type = #tpu.core_type<tc>, window_params = [{transform_indices = @transform_0, window_bounds = array<i64: 1, 16, 16>}, {transform_indices = @transform_1, window_bounds = array<i64: 1, 8, 16>}, {pipeline_mode = #tpu.pipeline_mode<synchronous>, transform_indices = @transform_2, window_bounds = array<i64: 16, 32>}, {pipeline_mode = #tpu.pipeline_mode<synchronous>, transform_indices = @transform_3, window_bounds = array<i64: 1, 32>}, {transform_indices = @transform_4, window_bounds = array<i64: 1, 8, 128>}, {transform_indices = @transform_5, window_bounds = array<i64: 1, 16, 32>}, {transform_indices = @transform_6, window_bounds = array<i64: 1, 4, 32>}, {transform_indices = @transform_7, window_bounds = array<i64: 1, 8, 32>}]} {
    %c0 = arith.constant 0 : index
    %c0_0 = arith.constant 0 : index
    %0 = vector.load %arg4[%c0, %c0_0] : memref<16x32xf32, #tpu.memory_space<vmem>>, vector<16x32xf32>
    %c0_1 = arith.constant 0 : index
    %c0_2 = arith.constant 0 : index
    %1 = vector.load %arg5[%c0_1, %c0_2] : memref<1x32xf32, #tpu.memory_space<vmem>>, vector<1x32xf32>
    %c0_i32 = arith.constant 0 : i32
    %2 = arith.cmpi eq, %arg1, %c0_i32 : i32
    %3 = arith.extui %2 : i1 to i32
    %c0_i32_3 = arith.constant 0 : i32
    %4 = arith.cmpi ne, %3, %c0_i32_3 : i32
    scf.if %4 {
      %c0_27 = arith.constant 0 : index
      %c0_28 = arith.constant 0 : index
      %c0_29 = arith.constant 0 : index
      %55 = vector.load %arg2[%c0_27, %c0_28, %c0_29] : memref<1x16x16xf32, #tpu.memory_space<vmem>>, vector<1x16x16xf32>
      %56 = vector.shape_cast %55 : vector<1x16x16xf32> to vector<16x16xf32>
      %cst_30 = arith.constant dense<0.000000e+00> : vector<16x32xf32>
      %57 = tpu.matmul %56, %0, %cst_30 {dimension_numbers = #tpu.dot_dimension_numbers<[1], [0], [0], [1], [0, 0, 1, 1], [], []>} : vector<16x16xf32>, vector<16x32xf32>, vector<16x32xf32> -> vector<16x32xf32>
      %58 = vector.broadcast %1 : vector<1x32xf32> to vector<16x32xf32>
      %59 = arith.addf %57, %58 : vector<16x32xf32>
      %60 = vector.shape_cast %59 : vector<16x32xf32> to vector<1x16x32xf32>
      %c0_31 = arith.constant 0 : index
      %c0_32 = arith.constant 0 : index
      %c0_33 = arith.constant 0 : index
      %61 = vector.load %arg7[%c0_31, %c0_32, %c0_33] : memref<1x16x32xf32, #tpu.memory_space<vmem>>, vector<1x16x32xf32>
      tpu.vector_store %arg7[%c0_31, %c0_32, %c0_33], %60 {strides = array<i32>} : memref<1x16x32xf32, #tpu.memory_space<vmem>>, vector<1x16x32xf32>,
      %62 = tpu.iota {dimensions = array<i32: 0>} : vector<128x16xi32>
      %63 = tpu.iota {dimensions = array<i32: 1>} : vector<128x16xi32>
      %c4_i32_34 = arith.constant 4 : i32
      %64 = vector.broadcast %c4_i32_34 : i32 to vector<128x16xi32>
      %65 = arith.muli %62, %64 : vector<128x16xi32>
      %66 = arith.cmpi sge, %63, %65 : vector<128x16xi32>
      %c1_i32 = arith.constant 1 : i32
      %67 = vector.broadcast %c1_i32 : i32 to vector<128x16xi32>
      %68 = arith.addi %62, %67 : vector<128x16xi32>
      %c4_i32_35 = arith.constant 4 : i32
      %69 = vector.broadcast %c4_i32_35 : i32 to vector<128x16xi32>
      %70 = arith.muli %68, %69 : vector<128x16xi32>
      %71 = arith.cmpi slt, %63, %70 : vector<128x16xi32>
      %72 = arith.andi %66, %71 : vector<128x16xi1>
      %73 = arith.extui %72 : vector<128x16xi1> to vector<128x16xi32>
      %74 = arith.sitofp %73 : vector<128x16xi32> to vector<128x16xf32>
      %cst_36 = arith.constant dense<0.000000e+00> : vector<128x32xf32>
      %75 = tpu.matmul %74, %59, %cst_36 {dimension_numbers = #tpu.dot_dimension_numbers<[1], [0], [0], [1], [0, 0, 1, 1], [], []>, precision = #tpu.contract_precision<fp32>} : vector<128x16xf32>, vector<16x32xf32>, vector<128x32xf32> -> vector<128x32xf32>
      %cst_37 = arith.constant 2.500000e-01 : f32
      %76 = vector.broadcast %cst_37 : f32 to vector<128x32xf32>
      %77 = arith.mulf %75, %76 : vector<128x32xf32>
      %c0_38 = arith.constant 0 : index
      %c0_39 = arith.constant 0 : index
      %78 = vector.load %arg10[%c0_38, %c0_39] : memref<128x32xf32, #tpu.memory_space<vmem>>, vector<128x32xf32>
      tpu.vector_store %arg10[%c0_38, %c0_39], %77 {strides = array<i32>} : memref<128x32xf32, #tpu.memory_space<vmem>>, vector<128x32xf32>,
      %79 = vector.extract_strided_slice %77 {offsets = [0, 0], sizes = [4, 32], strides = [1, 1]} : vector<128x32xf32> to vector<4x32xf32>
      %80 = vector.shape_cast %79 : vector<4x32xf32> to vector<1x4x32xf32>
      %c0_40 = arith.constant 0 : index
      %c0_41 = arith.constant 0 : index
      %c0_42 = arith.constant 0 : index
      %81 = vector.load %arg8[%c0_40, %c0_41, %c0_42] : memref<1x4x32xf32, #tpu.memory_space<vmem>>, vector<1x4x32xf32>
      tpu.vector_store %arg8[%c0_40, %c0_41, %c0_42], %80 {strides = array<i32>} : memref<1x4x32xf32, #tpu.memory_space<vmem>>, vector<1x4x32xf32>,
      %cst_43 = arith.constant 1.000000e+00 : f32
      %82 = vector.broadcast %cst_43 : f32 to vector<1x32xf32>
      %83 = arith.mulf %77, %77 : vector<128x32xf32>
      %cst_44 = arith.constant dense<0.000000e+00> : vector<1x128xf32>
      %84 = tpu.matmul %82, %83, %cst_44 {dimension_numbers = #tpu.dot_dimension_numbers<[1], [1], [0], [0], [0, 0, 1, 0], [], []>, precision = #tpu.contract_precision<fp32>} : vector<1x32xf32>, vector<128x32xf32>, vector<1x128xf32> -> vector<1x128xf32>
      %c0_45 = arith.constant 0 : index
      %c0_46 = arith.constant 0 : index
      %85 = vector.load %arg11[%c0_45, %c0_46] : memref<1x128xf32, #tpu.memory_space<vmem>>, vector<1x128xf32>
      tpu.vector_store %arg11[%c0_45, %c0_46], %84 {strides = array<i32>} : memref<1x128xf32, #tpu.memory_space<vmem>>, vector<1x128xf32>,
    } else {
    }
    %c0_4 = arith.constant 0 : index
    %c0_5 = arith.constant 0 : index
    %c0_6 = arith.constant 0 : index
    %5 = vector.load %arg3[%c0_4, %c0_5, %c0_6] : memref<1x8x16xf32, #tpu.memory_space<vmem>>, vector<1x8x16xf32>
    %6 = vector.shape_cast %5 : vector<1x8x16xf32> to vector<8x16xf32>
    %cst = arith.constant dense<0.000000e+00> : vector<8x32xf32>
    %7 = tpu.matmul %6, %0, %cst {dimension_numbers = #tpu.dot_dimension_numbers<[1], [0], [0], [1], [0, 0, 1, 1], [], []>} : vector<8x16xf32>, vector<16x32xf32>, vector<8x32xf32> -> vector<8x32xf32>
    %8 = vector.broadcast %1 : vector<1x32xf32> to vector<8x32xf32>
    %9 = arith.addf %7, %8 : vector<8x32xf32>
    %10 = vector.shape_cast %9 : vector<8x32xf32> to vector<1x8x32xf32>
    %c0_7 = arith.constant 0 : index
    %c0_8 = arith.constant 0 : index
    %c0_9 = arith.constant 0 : index
    %11 = vector.load %arg9[%c0_7, %c0_8, %c0_9] : memref<1x8x32xf32, #tpu.memory_space<vmem>>, vector<1x8x32xf32>
    tpu.vector_store %arg9[%c0_7, %c0_8, %c0_9], %10 {strides = array<i32>} : memref<1x8x32xf32, #tpu.memory_space<vmem>>, vector<1x8x32xf32>,
    %c0_10 = arith.constant 0 : index
    %c0_11 = arith.constant 0 : index
    %12 = vector.load %arg10[%c0_10, %c0_11] : memref<128x32xf32, #tpu.memory_space<vmem>>, vector<128x32xf32>
    %cst_12 = arith.constant dense<0.000000e+00> : vector<8x128xf32>
    %13 = tpu.matmul %9, %12, %cst_12 {dimension_numbers = #tpu.dot_dimension_numbers<[1], [1], [0], [0], [0, 0, 1, 0], [], []>, precision = #tpu.contract_precision<fp32>} : vector<8x32xf32>, vector<128x32xf32>, vector<8x128xf32> -> vector<8x128xf32>
    %14 = arith.mulf %9, %9 : vector<8x32xf32>
    %cst_13 = arith.constant dense<0.000000e+00> : vector<8xf32>
    %15 = vector.multi_reduction <add>, %14, %cst_13 [1] : vector<8x32xf32> to vector<8xf32>
    %16 = vector.shape_cast %15 : vector<8xf32> to vector<8x1xf32>
    %cst_14 = arith.constant 2.000000e+00 : f32
    %17 = vector.broadcast %cst_14 : f32 to vector<8x128xf32>
    %18 = arith.mulf %17, %13 : vector<8x128xf32>
    %19 = vector.broadcast %16 : vector<8x1xf32> to vector<8x128xf32>
    %20 = arith.subf %18, %19 : vector<8x128xf32>
    %c0_15 = arith.constant 0 : index
    %c0_16 = arith.constant 0 : index
    %21 = vector.load %arg11[%c0_15, %c0_16] : memref<1x128xf32, #tpu.memory_space<vmem>>, vector<1x128xf32>
    %22 = vector.broadcast %21 : vector<1x128xf32> to vector<8x128xf32>
    %23 = arith.subf %20, %22 : vector<8x128xf32>
    %24 = tpu.iota {dimensions = array<i32: 1>} : vector<8x128xi32>
    %c4_i32 = arith.constant 4 : i32
    %25 = vector.broadcast %c4_i32 : i32 to vector<8x128xi32>
    %26 = arith.cmpi slt, %24, %25 : vector<8x128xi32>
    %cst_17 = arith.constant 0xFF800000 : f32
    %27 = vector.broadcast %cst_17 : f32 to vector<8x128xf32>
    %28 = arith.select %26, %23, %27 : vector<8x128xi1>, vector<8x128xf32>
    %cst_18 = arith.constant dense<0xFF800000> : vector<8xf32>
    %29 = vector.multi_reduction <maximumf>, %28, %cst_18 [1] : vector<8x128xf32> to vector<8xf32>
    %30 = vector.shape_cast %29 : vector<8xf32> to vector<8x1xf32>
    %cst_19 = arith.constant 0x7F800000 : f32
    %31 = vector.broadcast %cst_19 : f32 to vector<8x128xf32>
    %32 = arith.select %26, %23, %31 : vector<8x128xi1>, vector<8x128xf32>
    %cst_20 = arith.constant dense<0x7F800000> : vector<8xf32>
    %33 = vector.multi_reduction <minimumf>, %32, %cst_20 [1] : vector<8x128xf32> to vector<8xf32>
    %34 = vector.shape_cast %33 : vector<8xf32> to vector<8x1xf32>
    %cst_21 = arith.constant 1.000000e+00 : f32
    %35 = vector.broadcast %cst_21 : f32 to vector<8x1xf32>
    %36 = arith.subf %34, %35 : vector<8x1xf32>
    %37 = vector.broadcast %30 : vector<8x1xf32> to vector<8x128xf32>
    %38 = arith.cmpf oeq, %23, %37 : vector<8x128xf32>
    %39 = arith.andi %26, %38 : vector<8x128xi1>
    %c4_i32_22 = arith.constant 4 : i32
    %40 = vector.broadcast %c4_i32_22 : i32 to vector<8x128xi32>
    %41 = arith.select %39, %24, %40 : vector<8x128xi1>, vector<8x128xi32>
    %cst_23 = arith.constant dense<2147483647> : vector<8xi32>
    %42 = vector.multi_reduction <minsi>, %41, %cst_23 [1] : vector<8x128xi32> to vector<8xi32>
    %43 = vector.shape_cast %42 : vector<8xi32> to vector<8x1xi32>
    %44 = arith.sitofp %43 : vector<8x1xi32> to vector<8x1xf32>
    %45 = vector.shape_cast %36 : vector<8x1xf32> to vector<8x1xf32>
    %46 = vector.broadcast %45 : vector<8x1xf32> to vector<8x128xf32>
    %47 = arith.select %26, %23, %46 : vector<8x128xi1>, vector<8x128xf32>
    %c5_i32 = arith.constant 5 : i32
    %48 = vector.broadcast %c5_i32 : i32 to vector<8x128xi32>
    %49 = arith.cmpi eq, %24, %48 : vector<8x128xi32>
    %50 = vector.shape_cast %44 : vector<8x1xf32> to vector<8x1xf32>
    %51 = vector.broadcast %50 : vector<8x1xf32> to vector<8x128xf32>
    %52 = arith.select %49, %51, %47 : vector<8x128xi1>, vector<8x128xf32>
    %53 = vector.shape_cast %52 : vector<8x128xf32> to vector<1x8x128xf32>
    %c0_24 = arith.constant 0 : index
    %c0_25 = arith.constant 0 : index
    %c0_26 = arith.constant 0 : index
    %54 = vector.load %arg6[%c0_24, %c0_25, %c0_26] : memref<1x8x128xf32, #tpu.memory_space<vmem>>, vector<1x8x128xf32>
    tpu.vector_store %arg6[%c0_24, %c0_25, %c0_26], %53 {strides = array<i32>} : memref<1x8x128xf32, #tpu.memory_space<vmem>>, vector<1x8x128xf32>,
    return
  }
  func.func @transform_0(%arg0: i32, %arg1: i32) -> (i32, i32, i32) {
    %c0_i32 = arith.constant 0 : i32
    %c0_i32_0 = arith.constant 0 : i32
    %c0_i32_1 = arith.constant 0 : i32
    return %arg0, %c0_i32, %c0_i32_0 : i32, i32, i32
  }
  func.func @transform_1(%arg0: i32, %arg1: i32) -> (i32, i32, i32) {
    %c0_i32 = arith.constant 0 : i32
    %c0_i32_0 = arith.constant 0 : i32
    return %arg0, %arg1, %c0_i32 : i32, i32, i32
  }
  func.func @transform_2(%arg0: i32, %arg1: i32) -> (i32, i32) {
    %c0_i32 = arith.constant 0 : i32
    %c0_i32_0 = arith.constant 0 : i32
    %c0_i32_1 = arith.constant 0 : i32
    return %c0_i32, %c0_i32_0 : i32, i32
  }
  func.func @transform_3(%arg0: i32, %arg1: i32) -> (i32, i32) {
    %c0_i32 = arith.constant 0 : i32
    %c0_i32_0 = arith.constant 0 : i32
    %c0_i32_1 = arith.constant 0 : i32
    return %c0_i32, %c0_i32_0 : i32, i32
  }
  func.func @transform_4(%arg0: i32, %arg1: i32) -> (i32, i32, i32) {
    %c0_i32 = arith.constant 0 : i32
    %c0_i32_0 = arith.constant 0 : i32
    return %arg0, %arg1, %c0_i32 : i32, i32, i32
  }
  func.func @transform_5(%arg0: i32, %arg1: i32) -> (i32, i32, i32) {
    %c0_i32 = arith.constant 0 : i32
    %c0_i32_0 = arith.constant 0 : i32
    %c0_i32_1 = arith.constant 0 : i32
    return %arg0, %c0_i32, %c0_i32_0 : i32, i32, i32
  }
  func.func @transform_6(%arg0: i32, %arg1: i32) -> (i32, i32, i32) {
    %c0_i32 = arith.constant 0 : i32
    %c0_i32_0 = arith.constant 0 : i32
    %c0_i32_1 = arith.constant 0 : i32
    return %arg0, %c0_i32, %c0_i32_0 : i32, i32, i32
  }
  func.func @transform_7(%arg0: i32, %arg1: i32) -> (i32, i32, i32) {
    %c0_i32 = arith.constant 0 : i32
    %c0_i32_0 = arith.constant 0 : i32
    return %arg0, %arg1, %c0_i32 : i32, i32, i32
  }
}

</mosaic_0001>

<llo_original>
// kernel: tpu_custom_call.1
$region0: #{tpu_custom_call.1}
  #allocation0 [shape = 'u32[]', space=smem, size = 0x4, offset = 0x4, fixed_abs, tag = 'smem constant byte address 0x4 - core index']
  #allocation1 [shape = 'u32[72,128]{1,0:T(1,128)}', space=vmem, size = 0x9000, scoped, tag = 'internal scratch']
  #allocation2 [shape = 'f32[128,32]{1,0:T(8,128)}', space=vmem, size = 0x10000, scoped, tag = 'scratch operand']
  #allocation3 [shape = 'f32[1,128]{1,0:T(1,128)}', space=vmem, size = 0x200, scoped, tag = 'scratch operand']
  %s0 = inlined_call_operand.hbm [shape: f32[2,16,16], index: 0, kind: input, shape index: {}]
  %s1 = inlined_call_operand.hbm [shape: f32[2,8,16], index: 1, kind: input, shape index: {}]
  %s2 = inlined_call_operand.hbm [shape: f32[16,32], index: 2, kind: input, shape index: {}]
  %s3 = inlined_call_operand.vmem [shape: f32[1,32], index: 3, kind: input, shape index: {}]
  %s4 = inlined_call_operand.hbm [shape: f32[2,8,128], index: 4, kind: output, shape index: {0}]
  %s5 = inlined_call_operand.hbm [shape: f32[2,16,32], index: 5, kind: output, shape index: {1}]
  %s6 = inlined_call_operand.hbm [shape: f32[2,4,32], index: 6, kind: output, shape index: {2}]
  %s7 = inlined_call_operand.hbm [shape: f32[2,8,32], index: 7, kind: output, shape index: {3}]
  %8 = xla_tuple %s4, %s5, %s6, %s7
  %s9 = sld [smem:[#allocation0]]
  $region89: #{tpu_custom_call.1} parent=0
    _
  %s11 = ssub.s32 1, %s9
  %s12 = scalar_select 0, %s11, %s9
  $region1: #{tpu_custom_call.1} parent=0
    #allocation4 [shape = 'u8[16384]{0}', space=vmem, size = 0x4000, scoped, tag = 'input window, operand 0']
    #allocation5 [shape = 's32[2]{0}', space=sflag, size = 0x8, scoped, tag = 'scoped memory for tpu_custom_call.1']
    #allocation6 [shape = 's32[2]{0}', space=sflag, size = 0x8, scoped, tag = 'scoped memory for tpu_custom_call.1']
    #allocation7 [shape = 'u8[8192]{0}', space=vmem, size = 0x2000, scoped, tag = 'input window, operand 1']
    #allocation8 [shape = 's32[2]{0}', space=sflag, size = 0x8, scoped, tag = 'scoped memory for tpu_custom_call.1']
    #allocation9 [shape = 'u8[8192]{0}', space=vmem, size = 0x2000, scoped, tag = 'input window, operand 2, single buffered']
    #allocation10 [shape = 'u8[8192]{0}', space=vmem, size = 0x2000, scoped, tag = 'output window, operand 0']
    #allocation11 [shape = 'u8[16384]{0}', space=vmem, size = 0x4000, scoped, tag = 'output window, operand 1']
    #allocation12 [shape = 's32[2]{0}', space=sflag, size = 0x8, scoped, tag = 'scoped memory for tpu_custom_call.1']
    #allocation13 [shape = 'u8[4096]{0}', space=vmem, size = 0x1000, scoped, tag = 'output window, operand 2']
    #allocation14 [shape = 'u8[8192]{0}', space=vmem, size = 0x2000, scoped, tag = 'output window, operand 3']
    #allocation15 [shape = 's32[2]{0}', space=sflag, size = 0x8, scoped, tag = 'scoped memory for tpu_custom_call.1']
    %13 = vsyncpa [#allocation5], 0
    %s14 = scalar_lea.sflag [#allocation5], 1
    %15 = vsyncpa %s14, 0
    %16 = vsyncpa [#allocation8], 0
    %s17 = scalar_lea.sflag [#allocation8], 1
    %18 = vsyncpa %s17, 0
    %19 = vsyncpa [#allocation6], 0
    %s20 = scalar_lea.sflag [#allocation6], 1
    %21 = vsyncpa %s20, 0
    %22 = vsyncpa [#allocation12], 0
    %s23 = scalar_lea.sflag [#allocation12], 1
    %24 = vsyncpa %s23, 0
    %25 = vsyncpa [#allocation15], 0
    %s26 = scalar_lea.sflag [#allocation15], 1
    %27 = vsyncpa %s26, 0
    loop: start=0, step=1, limit=4
    $region2: #{tpu_custom_call.1} parent=1 // loop_pre_header
      _
    $region3: #{tpu_custom_call.1} parent=1 // loop_header
      %s29 = sphi 0, %s33
      %p30 = scmp.ge.s32.totalorder %s29, 4
      %s36 = sphi 0, %s48
      %s37 = sphi 0, %s44
      %s38 = sphi 0, %s36
      %s39 = sphi 0, %s37
      %s40 = sphi 0, %s38
      %s41 = sphi 0, %s39
      %s51 = sphi 0, %s53
      %s54 = sphi 0, %s51
      %s55 = sphi 0, %s54
      %s71 = sphi 0, %s55
      %s79 = sphi 0, %s81
      %s82 = sphi 0, %s79
      %s83 = sphi 0, %s82
      %s99 = sphi 0, %s83
      %s103 = sphi 0, %s103
      %s105 = sphi 0, %s103
      %s106 = sphi 0, %s105
      %s120 = sphi 0, %s106
      %s124 = sphi 0, %s124
      %s126 = sphi 0, %s124
      %s127 = sphi 0, %s126
      %s141 = sphi 0, %s127
      %s149 = sphi 0, %s151
      %s152 = sphi 0, %s149
      %s153 = sphi 0, %s152
      %s169 = sphi 0, %s153
      %s175 = sphi 0, %s177
      %s178 = sphi 0, %s175
      %s179 = sphi 0, %s178
      %s195 = sphi 0, %s179
      %s201 = sphi 0, %s203
      %s204 = sphi 0, %s201
      %s205 = sphi 0, %s204
      %s221 = sphi 0, %s205
      %s229 = sphi 0, %s231
      %s232 = sphi 0, %s229
      %s233 = sphi 0, %s232
      %s249 = sphi 0, %s233
    $region4: #{tpu_custom_call.1} parent=1 // loop_header_branch
      %32 = sbr.rel (%p30) target = $region8
    $region5: #{tpu_custom_call.1} parent=1 // loop_body
      %s34 = ssub.s32 %s29, 1
      %s35 = ssub.s32 %s29, 2
      %s42 = sadd.s32 1, %s37
      %p43 = scmp.ge.s32.totalorder %s42, 1
      %s44 = scalar_select %p43, 0, %s42
      %s45 = sadd.s32 1, %s36
      %s46 = scalar_select %p43, %s45, %s36
      %p47 = scmp.ge.s32.totalorder %s46, 2
      %s48 = scalar_select %p47, 0, %s46
      %s49 = ssub.s32 %s36, %s48
      %p50 = scmp.eq.s32.totalorder %s49, 0
      %s52 = sadd.s32 %s51, 1
      %s53 = scalar_select %p50, %s51, %s52
      %p56 = pneg %p50
      %p57 = scmp.eq.s32.totalorder %s29, 1
      %p58 = por %p56, %p57
      %p59 = scmp.ne.s32.totalorder %s51, %s54
      %p60 = scmp.eq.s32.totalorder %s29, 0
      %p61 = por %p59, %p60
      %p62 = scmp.ne.s32.totalorder %s51, %s54
      %p63 = scmp.eq.s32.totalorder %s34, 1
      %p64 = por %p62, %p63
      %p65 = scmp.ne.s32.totalorder %s54, %s55
      %p66 = scmp.eq.s32.totalorder %s34, 0
      %p67 = por %p65, %p66
      %p68 = scmp.ne.s32.totalorder %s54, %s55
      %p69 = scmp.eq.s32.totalorder %s35, 1
      %p70 = por %p68, %p69
      %p72 = scmp.ne.s32.totalorder %s55, %s71
      %p73 = scmp.eq.s32.totalorder %s35, 0
      %p74 = por %p72, %p73
      %s75 = ssub.s32 %s36, %s48
      %s76 = ssub.s32 %s37, %s44
      %s77 = sor.u32 %s75, %s76
      %p78 = scmp.eq.s32.totalorder %s77, 0
      %s80 = sadd.s32 %s79, 1
      %s81 = scalar_select %p78, %s79, %s80
      %p84 = pneg %p78
      %p85 = scmp.eq.s32.totalorder %s29, 1
      %p86 = por %p84, %p85
      %p87 = scmp.ne.s32.totalorder %s79, %s82
      %p88 = scmp.eq.s32.totalorder %s29, 0
      %p89 = por %p87, %p88
      %p90 = scmp.ne.s32.totalorder %s79, %s82
      %p91 = scmp.eq.s32.totalorder %s34, 1
      %p92 = por %p90, %p91
      %p93 = scmp.ne.s32.totalorder %s82, %s83
      %p94 = scmp.eq.s32.totalorder %s34, 0
      %p95 = por %p93, %p94
      %p96 = scmp.ne.s32.totalorder %s82, %s83
      %p97 = scmp.eq.s32.totalorder %s35, 1
      %p98 = por %p96, %p97
      %p100 = scmp.ne.s32.totalorder %s83, %s99
      %p101 = scmp.eq.s32.totalorder %s35, 0
      %p102 = por %p100, %p101
      %s104 = sadd.s32 %s103, 1
      %p107 = scmp.eq.s32.totalorder %s29, 1
      %p108 = scmp.ne.s32.totalorder %s103, %s105
      %p109 = scmp.eq.s32.totalorder %s29, 0
      %p110 = por %p108, %p109
      %p111 = scmp.ne.s32.totalorder %s103, %s105
      %p112 = scmp.eq.s32.totalorder %s34, 1
      %p113 = por %p111, %p112
      %p114 = scmp.ne.s32.totalorder %s105, %s106
      %p115 = scmp.eq.s32.totalorder %s34, 0
      %p116 = por %p114, %p115
      %p117 = scmp.ne.s32.totalorder %s105, %s106
      %p118 = scmp.eq.s32.totalorder %s35, 1
      %p119 = por %p117, %p118
      %p121 = scmp.ne.s32.totalorder %s106, %s120
      %p122 = scmp.eq.s32.totalorder %s35, 0
      %p123 = por %p121, %p122
      %s125 = sadd.s32 %s124, 1
      %p128 = scmp.eq.s32.totalorder %s29, 1
      %p129 = scmp.ne.s32.totalorder %s124, %s126
      %p130 = scmp.eq.s32.totalorder %s29, 0
      %p131 = por %p129, %p130
      %p132 = scmp.ne.s32.totalorder %s124, %s126
      %p133 = scmp.eq.s32.totalorder %s34, 1
      %p134 = por %p132, %p133
      %p135 = scmp.ne.s32.totalorder %s126, %s127
      %p136 = scmp.eq.s32.totalorder %s34, 0
      %p137 = por %p135, %p136
      %p138 = scmp.ne.s32.totalorder %s126, %s127
      %p139 = scmp.eq.s32.totalorder %s35, 1
      %p140 = por %p138, %p139
      %p142 = scmp.ne.s32.totalorder %s127, %s141
      %p143 = scmp.eq.s32.totalorder %s35, 0
      %p144 = por %p142, %p143
      %s145 = ssub.s32 %s36, %s48
      %s146 = ssub.s32 %s37, %s44
      %s147 = sor.u32 %s145, %s146
      %p148 = scmp.eq.s32.totalorder %s147, 0
      %s150 = sadd.s32 %s149, 1
      %s151 = scalar_select %p148, %s149, %s150
      %p154 = pneg %p148
      %p155 = scmp.eq.s32.totalorder %s29, 1
      %p156 = por %p154, %p155
      %p157 = scmp.ne.s32.totalorder %s149, %s152
      %p158 = scmp.eq.s32.totalorder %s29, 0
      %p159 = por %p157, %p158
      %p160 = scmp.ne.s32.totalorder %s149, %s152
      %p161 = scmp.eq.s32.totalorder %s34, 1
      %p162 = por %p160, %p161
      %p163 = scmp.ne.s32.totalorder %s152, %s153
      %p164 = scmp.eq.s32.totalorder %s34, 0
      %p165 = por %p163, %p164
      %p166 = scmp.ne.s32.totalorder %s152, %s153
      %p167 = scmp.eq.s32.totalorder %s35, 1
      %p168 = por %p166, %p167
      %p170 = scmp.ne.s32.totalorder %s153, %s169
      %p171 = scmp.eq.s32.totalorder %s35, 0
      %p172 = por %p170, %p171
      %s173 = ssub.s32 %s36, %s48
      %p174 = scmp.eq.s32.totalorder %s173, 0
      %s176 = sadd.s32 %s175, 1
      %s177 = scalar_select %p174, %s175, %s176
      %p180 = pneg %p174
      %p181 = scmp.eq.s32.totalorder %s29, 1
      %p182 = por %p180, %p181
      %p183 = scmp.ne.s32.totalorder %s175, %s178
      %p184 = scmp.eq.s32.totalorder %s29, 0
      %p185 = por %p183, %p184
      %p186 = scmp.ne.s32.totalorder %s175, %s178
      %p187 = scmp.eq.s32.totalorder %s34, 1
      %p188 = por %p186, %p187
      %p189 = scmp.ne.s32.totalorder %s178, %s179
      %p190 = scmp.eq.s32.totalorder %s34, 0
      %p191 = por %p189, %p190
      %p192 = scmp.ne.s32.totalorder %s178, %s179
      %p193 = scmp.eq.s32.totalorder %s35, 1
      %p194 = por %p192, %p193
      %p196 = scmp.ne.s32.totalorder %s179, %s195
      %p197 = scmp.eq.s32.totalorder %s35, 0
      %p198 = por %p196, %p197
      %s199 = ssub.s32 %s36, %s48
      %p200 = scmp.eq.s32.totalorder %s199, 0
      %s202 = sadd.s32 %s201, 1
      %s203 = scalar_select %p200, %s201, %s202
      %p206 = pneg %p200
      %p207 = scmp.eq.s32.totalorder %s29, 1
      %p208 = por %p206, %p207
      %p209 = scmp.ne.s32.totalorder %s201, %s204
      %p210 = scmp.eq.s32.totalorder %s29, 0
      %p211 = por %p209, %p210
      %p212 = scmp.ne.s32.totalorder %s201, %s204
      %p213 = scmp.eq.s32.totalorder %s34, 1
      %p214 = por %p212, %p213
      %p215 = scmp.ne.s32.totalorder %s204, %s205
      %p216 = scmp.eq.s32.totalorder %s34, 0
      %p217 = por %p215, %p216
      %p218 = scmp.ne.s32.totalorder %s204, %s205
      %p219 = scmp.eq.s32.totalorder %s35, 1
      %p220 = por %p218, %p219
      %p222 = scmp.ne.s32.totalorder %s205, %s221
      %p223 = scmp.eq.s32.totalorder %s35, 0
      %p224 = por %p222, %p223
      %s225 = ssub.s32 %s36, %s48
      %s226 = ssub.s32 %s37, %s44
      %s227 = sor.u32 %s225, %s226
      %p228 = scmp.eq.s32.totalorder %s227, 0
      %s230 = sadd.s32 %s229, 1
      %s231 = scalar_select %p228, %s229, %s230
      %p234 = pneg %p228
      %p235 = scmp.eq.s32.totalorder %s29, 1
      %p236 = por %p234, %p235
      %p237 = scmp.ne.s32.totalorder %s229, %s232
      %p238 = scmp.eq.s32.totalorder %s29, 0
      %p239 = por %p237, %p238
      %p240 = scmp.ne.s32.totalorder %s229, %s232
      %p241 = scmp.eq.s32.totalorder %s34, 1
      %p242 = por %p240, %p241
      %p243 = scmp.ne.s32.totalorder %s232, %s233
      %p244 = scmp.eq.s32.totalorder %s34, 0
      %p245 = por %p243, %p244
      %p246 = scmp.ne.s32.totalorder %s232, %s233
      %p247 = scmp.eq.s32.totalorder %s35, 1
      %p248 = por %p246, %p247
      %p250 = scmp.ne.s32.totalorder %s233, %s249
      %p251 = scmp.eq.s32.totalorder %s35, 0
      %p252 = por %p250, %p251
      %p253 = scmp.le.s32.totalorder 1, %s29
      %p254 = scmp.lt.s32.totalorder %s29, 3
      %p255 = pnand %p253, %p254
      %p256 = pneg %p255
      // Predicated region
      $region9: #{tpu_custom_call.1} parent=5 // pred_check
        _
      $region10: #{tpu_custom_call.1} parent=5 // pred_check_branch
        %258 = sbr.rel (%p255) target = $region12
      $region11: #{tpu_custom_call.1} parent=5 // pred_region
        %s259 = ssub.s32 %s29, 1
        // Predicated region
        $region13: #{tpu_custom_call.1} parent=11 // pred_check
          %p260 = pneg %p116
        $region14: #{tpu_custom_call.1} parent=11 // pred_check_branch
          %262 = sbr.rel (%p260) target = $region16
        $region15: #{tpu_custom_call.1} parent=11 // pred_region
          %264 = vsyncadd [#allocation8], 0
          %s265 = sshll.u32 %s2, 4
          %s266 = int_to_ptr.hbm [resolvable:$true] %s265
          %s267 = sshll.u32 [#allocation9], 4
          %s268 = int_to_ptr.vmem [resolvable:$true] %s267
          %273 = dma.hbm_to_vmem [thread:$0]  %s266, 256, %s268, [#allocation8], 128, 128, 8
        $region16: #{tpu_custom_call.1} parent=11 // pred_fallthru
          _
        // Predicated region
        $region17: #{tpu_custom_call.1} parent=11 // pred_check
          %p274 = pneg %p137
        $region18: #{tpu_custom_call.1} parent=11 // pred_check_branch
          %276 = sbr.rel (%p274) target = $region20
        $region19: #{tpu_custom_call.1} parent=11 // pred_region
          _
        $region20: #{tpu_custom_call.1} parent=11 // pred_fallthru
          _
      $region12: #{tpu_custom_call.1} parent=5 // pred_fallthru
        _
      %p277 = scmp.lt.s32.totalorder %s29, 2
      // Predicated region
      $region21: #{tpu_custom_call.1} parent=5 // pred_check
        %p278 = pneg %p277
      $region22: #{tpu_custom_call.1} parent=5 // pred_check_branch
        %280 = sbr.rel (%p278) target = $region24
      $region23: #{tpu_custom_call.1} parent=5 // pred_region
        // Predicated region
        $region25: #{tpu_custom_call.1} parent=23 // pred_check
          %p281 = pneg %p61
        $region26: #{tpu_custom_call.1} parent=23 // pred_check_branch
          %283 = sbr.rel (%p281) target = $region28
        $region27: #{tpu_custom_call.1} parent=23 // pred_region
          %s284 = sand.u32 %s51, 1
          %s285 = scalar_lea.sflag [#allocation5], %s284
          %s286 = sand.u32 %s51, 1
          %s287 = smul.addr %s286, 16
          %s288 = scalar_lea.vmem [#allocation4], %s287
          %290 = vsyncadd %s285, 0
          %s291 = smul.addr %s36, 2
          %s292 = smul.addr %s291, 8
          %s293 = scalar_lea.hbm %s0, %s292
          %s294 = sshll.u32 %s293, 4
          %s295 = int_to_ptr.hbm [resolvable:$true] %s294
          %s296 = sshll.u32 %s288, 4
          %s297 = int_to_ptr.vmem [resolvable:$true] %s296
          %302 = dma.hbm_to_vmem [thread:$0]  %s295, 256, %s297, %s285, 128, 128, 8
        $region28: #{tpu_custom_call.1} parent=23 // pred_fallthru
          _
        // Predicated region
        $region29: #{tpu_custom_call.1} parent=23 // pred_check
          %p303 = pneg %p89
        $region30: #{tpu_custom_call.1} parent=23 // pred_check_branch
          %305 = sbr.rel (%p303) target = $region32
        $region31: #{tpu_custom_call.1} parent=23 // pred_region
          %s306 = sand.u32 %s29, 1
          %s307 = scalar_lea.sflag [#allocation8], %s306
          %s308 = sand.u32 %s79, 1
          %s309 = smul.addr %s308, 8
          %s310 = scalar_lea.vmem [#allocation7], %s309
          %312 = vsyncadd %s307, 0
          %s313 = sadd.s32 %s37, %s36
          %s314 = smul.addr %s313, 8
          %s315 = scalar_lea.hbm %s1, %s314
          %s317 = sshll.u32 %s315, 4
          %s318 = int_to_ptr.hbm [resolvable:$true] %s317
          %s319 = sshll.u32 %s310, 4
          %s320 = int_to_ptr.vmem [resolvable:$true] %s319
          %322 = dma.hbm_to_vmem [thread:$0]  %s318, 128, %s320, %s307
        $region32: #{tpu_custom_call.1} parent=23 // pred_fallthru
          _
      $region24: #{tpu_custom_call.1} parent=5 // pred_fallthru
        _
      %p323 = scmp.le.s32.totalorder 1, %s29
      %p324 = scmp.lt.s32.totalorder %s29, 3
      %p325 = pnand %p323, %p324
      %p326 = pneg %p325
      // Predicated region
      $region33: #{tpu_custom_call.1} parent=5 // pred_check
        _
      $region34: #{tpu_custom_call.1} parent=5 // pred_check_branch
        %328 = sbr.rel (%p325) target = $region36
      $region35: #{tpu_custom_call.1} parent=5 // pred_region
        %s329 = ssub.s32 %s29, 1
        %s330 = sand.u32 %s54, 1
        %s331 = scalar_lea.sflag [#allocation5], %s330
        %s332 = sand.u32 %s54, 1
        %s333 = smul.addr %s332, 16
        %s334 = scalar_lea.vmem [#allocation4], %s333
        // Predicated region
        $region37: #{tpu_custom_call.1} parent=35 // pred_check
          %p335 = pneg %p67
        $region38: #{tpu_custom_call.1} parent=35 // pred_check_branch
          %337 = sbr.rel (%p335) target = $region40
        $region39: #{tpu_custom_call.1} parent=35 // pred_region
          %339 = dma.done %s331, 256
        $region40: #{tpu_custom_call.1} parent=35 // pred_fallthru
          _
        %s340 = sand.u32 %s34, 1
        %s341 = scalar_lea.sflag [#allocation8], %s340
        %s342 = sand.u32 %s82, 1
        %s343 = smul.addr %s342, 8
        %s344 = scalar_lea.vmem [#allocation7], %s343
        // Predicated region
        $region41: #{tpu_custom_call.1} parent=35 // pred_check
          %p345 = pneg %p95
        $region42: #{tpu_custom_call.1} parent=35 // pred_check_branch
          %347 = sbr.rel (%p345) target = $region44
        $region43: #{tpu_custom_call.1} parent=35 // pred_region
          %349 = dma.done %s341, 128
        $region44: #{tpu_custom_call.1} parent=35 // pred_fallthru
          _
        // Predicated region
        $region45: #{tpu_custom_call.1} parent=35 // pred_check
          %p350 = pneg %p116
        $region46: #{tpu_custom_call.1} parent=35 // pred_check_branch
          %352 = sbr.rel (%p350) target = $region48
        $region47: #{tpu_custom_call.1} parent=35 // pred_region
          %354 = dma.done [#allocation8], 256
        $region48: #{tpu_custom_call.1} parent=35 // pred_fallthru
          _
        %s355 = sand.u32 %s54, 1
        %s356 = scalar_lea.sflag [#allocation5], %s355
        %s357 = sand.u32 %s54, 1
        %s358 = smul.addr %s357, 16
        %s359 = scalar_lea.vmem [#allocation4], %s358
        %p360 = pneg %p67
        %p361 = pneg %p64
        %s362 = sand.u32 %s34, 1
        %s363 = scalar_lea.sflag [#allocation8], %s362
        %s364 = sand.u32 %s82, 1
        %s365 = smul.addr %s364, 8
        %s366 = scalar_lea.vmem [#allocation7], %s365
        %p367 = pneg %p95
        %p368 = pneg %p92
        %p369 = pneg %p116
        %p370 = pneg %p113
        %p371 = pneg %p137
        %p372 = pneg %p134
        %p373 = pneg %p165
        %p374 = pneg %p162
        %s375 = sand.u32 %s152, 1
        %s376 = scalar_lea.sflag [#allocation6], %s375
        %s377 = sand.u32 %s152, 1
        %s378 = smul.addr %s377, 8
        %s379 = scalar_lea.vmem [#allocation10], %s378
        %p380 = pneg %p191
        %p381 = pneg %p188
        %s382 = sand.u32 %s34, 1
        %s383 = scalar_lea.sflag [#allocation12], %s382
        %s384 = sand.u32 %s178, 1
        %s385 = smul.addr %s384, 16
        %s386 = scalar_lea.vmem [#allocation11], %s385
        %p387 = pneg %p217
        %p388 = pneg %p214
        %s389 = sand.u32 %s34, 1
        %s390 = scalar_lea.sflag [#allocation12], %s389
        %s391 = sand.u32 %s204, 1
        %s392 = smul.addr %s391, 4
        %s393 = scalar_lea.vmem [#allocation13], %s392
        %p394 = pneg %p245
        %p395 = pneg %p242
        %s396 = sand.u32 %s232, 1
        %s397 = scalar_lea.sflag [#allocation15], %s396
        %s398 = sand.u32 %s232, 1
        %s399 = smul.addr %s398, 8
        %s400 = scalar_lea.vmem [#allocation14], %s399
        %v401 = vld [vmem:[#allocation9] sm:$0xff]
        %v402 = vld [vmem:[#allocation9 + $0x8] sm:$0xff]
        %v403 = vld [vmem:[%s3] sm:$0x1]
        %p404 = scmp.eq.s32.totalorder %s39, 0
        // Predicated region
        $region49: #{tpu_custom_call.1} parent=35 // pred_check
          %p405 = pneg %p404
        $region50: #{tpu_custom_call.1} parent=35 // pred_check_branch
          %407 = sbr.rel (%p405) target = $region52
        $region51: #{tpu_custom_call.1} parent=35 // pred_region
          %v408 = vld [vmem:[%s334] sm:$0xff]
          %v409 = vld [vmem:[%s334 + $0x8] sm:$0xff]
          %v411 = vperm.slane %v403, 0
          %vm413 = vcmask 130048
          %v415 = vsel %vm413, %v408, 0
          %v418 = vsel %vm413, %v409, 0
          %420 = vmatpush.msra.mxu0 0.0
          %421 = vmatpush.msra.mxu0 0.0
          %422 = vmatpush.msra.mxu0 0.0
          %423 = vmatpush.msra.mxu0 0.0
          %424 = vmatpush.msra.mxu0 0.0
          %425 = vmatpush.msra.mxu0 0.0
          %426 = vmatpush.msra.mxu0 0.0
          %427 = vmatpush.msra.mxu0 0.0
          %428 = vmatpush.msra.mxu0 0.0
          %429 = vmatpush.msra.mxu0 0.0
          %430 = vmatpush.msra.mxu0 0.0
          %431 = vmatpush.msra.mxu0 0.0
          %432 = vmatpush.msra.mxu0 0.0
          %433 = vmatpush.msra.mxu0 0.0
          %434 = vmatpush.msra.mxu0 %v402
          %435 = vmatpush.msra.mxu0 %v401
          %436 = vmatmul.f32.gmra.mxu0 %v415
          %v437 = vpop.f32.mrf.mxu0
          %v438 = vadd.f32 %v411, %v437
          %439 = vmatmul.f32.gmra.mxu0 %v418
          %v440 = vpop.f32.mrf.mxu0
          %v441 = vadd.f32 %v411, %v440
          %442 = vdwg.mxu0
          %vm443 = vcmask 261120
          %444 = vst.msk [vmem:[%s386] sm:$0xff] %vm443, %v438
          %445 = vst.msk [vmem:[%s386 + $0x8] sm:$0xff] %vm443, %v441
          %v446 = vlaneseq
          %v447 = vshrl.u32 %v446, 7
          %v448 = vadd.s32 %v447, 8
          %v449 = vadd.s32 %v447, 16
          %v450 = vadd.s32 %v447, 24
          %v451 = vadd.s32 %v447, 32
          %v452 = vadd.s32 %v447, 40
          %v453 = vadd.s32 %v447, 48
          %v454 = vadd.s32 %v447, 56
          %v455 = vadd.s32 %v447, 64
          %v456 = vadd.s32 %v447, 72
          %v457 = vadd.s32 %v447, 80
          %v458 = vadd.s32 %v447, 88
          %v459 = vadd.s32 %v447, 96
          %v460 = vadd.s32 %v447, 104
          %v461 = vadd.s32 %v447, 112
          %v462 = vadd.s32 %v447, 120
          %v463 = vlaneseq
          %v464 = vand.u32 %v463, 127
          %v465 = vmul.u32 %v447, 4
          %v466 = vmul.u32 %v448, 4
          %v467 = vmul.u32 %v449, 4
          %v468 = vmul.u32 %v450, 4
          %v469 = vmul.u32 %v451, 4
          %v470 = vmul.u32 %v452, 4
          %v471 = vmul.u32 %v453, 4
          %v472 = vmul.u32 %v454, 4
          %v473 = vmul.u32 %v455, 4
          %v474 = vmul.u32 %v456, 4
          %v475 = vmul.u32 %v457, 4
          %v476 = vmul.u32 %v458, 4
          %v477 = vmul.u32 %v459, 4
          %v478 = vmul.u32 %v460, 4
          %v479 = vmul.u32 %v461, 4
          %v480 = vmul.u32 %v462, 4
          %vm481 = vcmp.ge.s32.totalorder %v464, %v465
          %vm482 = vcmp.ge.s32.totalorder %v464, %v466
          %vm483 = vcmp.ge.s32.totalorder %v464, %v467
          %vm484 = vcmp.ge.s32.totalorder %v464, %v468
          %vm485 = vcmp.ge.s32.totalorder %v464, %v469
          %vm486 = vcmp.ge.s32.totalorder %v464, %v470
          %vm487 = vcmp.ge.s32.totalorder %v464, %v471
          %vm488 = vcmp.ge.s32.totalorder %v464, %v472
          %vm489 = vcmp.ge.s32.totalorder %v464, %v473
          %vm490 = vcmp.ge.s32.totalorder %v464, %v474
          %vm491 = vcmp.ge.s32.totalorder %v464, %v475
          %vm492 = vcmp.ge.s32.totalorder %v464, %v476
          %vm493 = vcmp.ge.s32.totalorder %v464, %v477
          %vm494 = vcmp.ge.s32.totalorder %v464, %v478
          %vm495 = vcmp.ge.s32.totalorder %v464, %v479
          %vm496 = vcmp.ge.s32.totalorder %v464, %v480
          %v497 = vadd.s32 %v447, 1
          %v498 = vadd.s32 %v448, 1
          %v499 = vadd.s32 %v449, 1
          %v500 = vadd.s32 %v450, 1
          %v501 = vadd.s32 %v451, 1
          %v502 = vadd.s32 %v452, 1
          %v503 = vadd.s32 %v453, 1
          %v504 = vadd.s32 %v454, 1
          %v505 = vadd.s32 %v455, 1
          %v506 = vadd.s32 %v456, 1
          %v507 = vadd.s32 %v457, 1
          %v508 = vadd.s32 %v458, 1
          %v509 = vadd.s32 %v459, 1
          %v510 = vadd.s32 %v460, 1
          %v511 = vadd.s32 %v461, 1
          %v512 = vadd.s32 %v462, 1
          %v513 = vmul.u32 %v497, 4
          %v514 = vmul.u32 %v498, 4
          %v515 = vmul.u32 %v499, 4
          %v516 = vmul.u32 %v500, 4
          %v517 = vmul.u32 %v501, 4
          %v518 = vmul.u32 %v502, 4
          %v519 = vmul.u32 %v503, 4
          %v520 = vmul.u32 %v504, 4
          %v521 = vmul.u32 %v505, 4
          %v522 = vmul.u32 %v506, 4
          %v523 = vmul.u32 %v507, 4
          %v524 = vmul.u32 %v508, 4
          %v525 = vmul.u32 %v509, 4
          %v526 = vmul.u32 %v510, 4
          %v527 = vmul.u32 %v511, 4
          %v528 = vmul.u32 %v512, 4
          %vm529 = vcmp.lt.s32.totalorder %v464, %v513
          %vm530 = vcmp.lt.s32.totalorder %v464, %v514
          %vm531 = vcmp.lt.s32.totalorder %v464, %v515
          %vm532 = vcmp.lt.s32.totalorder %v464, %v516
          %vm533 = vcmp.lt.s32.totalorder %v464, %v517
          %vm534 = vcmp.lt.s32.totalorder %v464, %v518
          %vm535 = vcmp.lt.s32.totalorder %v464, %v519
          %vm536 = vcmp.lt.s32.totalorder %v464, %v520
          %vm537 = vcmp.lt.s32.totalorder %v464, %v521
          %vm538 = vcmp.lt.s32.totalorder %v464, %v522
          %vm539 = vcmp.lt.s32.totalorder %v464, %v523
          %vm540 = vcmp.lt.s32.totalorder %v464, %v524
          %vm541 = vcmp.lt.s32.totalorder %v464, %v525
          %vm542 = vcmp.lt.s32.totalorder %v464, %v526
          %vm543 = vcmp.lt.s32.totalorder %v464, %v527
          %vm544 = vcmp.lt.s32.totalorder %v464, %v528
          %vm545 = vmand %vm481, %vm529
          %vm546 = vmand %vm482, %vm530
          %vm547 = vmand %vm483, %vm531
          %vm548 = vmand %vm484, %vm532
          %vm549 = vmand %vm485, %vm533
          %vm550 = vmand %vm486, %vm534
          %vm551 = vmand %vm487, %vm535
          %vm552 = vmand %vm488, %vm536
          %vm553 = vmand %vm489, %vm537
          %vm554 = vmand %vm490, %vm538
          %vm555 = vmand %vm491, %vm539
          %vm556 = vmand %vm492, %vm540
          %vm557 = vmand %vm493, %vm541
          %vm558 = vmand %vm494, %vm542
          %vm559 = vmand %vm495, %vm543
          %vm560 = vmand %vm496, %vm544
          %v561 = vsel %vm545, 1, 0
          %v562 = vsel %vm546, 1, 0
          %v563 = vsel %vm547, 1, 0
          %v564 = vsel %vm548, 1, 0
          %v565 = vsel %vm549, 1, 0
          %v566 = vsel %vm550, 1, 0
          %v567 = vsel %vm551, 1, 0
          %v568 = vsel %vm552, 1, 0
          %v569 = vsel %vm553, 1, 0
          %v570 = vsel %vm554, 1, 0
          %v571 = vsel %vm555, 1, 0
          %v572 = vsel %vm556, 1, 0
          %v573 = vsel %vm557, 1, 0
          %v574 = vsel %vm558, 1, 0
          %v575 = vsel %vm559, 1, 0
          %v576 = vsel %vm560, 1, 0
          %v577 = vcvt.s32.f32 %v561
          %v578 = vcvt.s32.f32 %v562
          %v579 = vcvt.s32.f32 %v563
          %v580 = vcvt.s32.f32 %v564
          %v581 = vcvt.s32.f32 %v565
          %v582 = vcvt.s32.f32 %v566
          %v583 = vcvt.s32.f32 %v567
          %v584 = vcvt.s32.f32 %v568
          %v585 = vcvt.s32.f32 %v569
          %v586 = vcvt.s32.f32 %v570
          %v587 = vcvt.s32.f32 %v571
          %v588 = vcvt.s32.f32 %v572
          %v589 = vcvt.s32.f32 %v573
          %v590 = vcvt.s32.f32 %v574
          %v591 = vcvt.s32.f32 %v575
          %v592 = vcvt.s32.f32 %v576
          %v594 = vsel %vm413, %v577, 0
          %v597 = vsel %vm413, %v578, 0
          %v600 = vsel %vm413, %v579, 0
          %v603 = vsel %vm413, %v580, 0
          %v606 = vsel %vm413, %v581, 0
          %v609 = vsel %vm413, %v582, 0
          %v612 = vsel %vm413, %v583, 0
          %v615 = vsel %vm413, %v584, 0
          %v618 = vsel %vm413, %v585, 0
          %v621 = vsel %vm413, %v586, 0
          %v624 = vsel %vm413, %v587, 0
          %v627 = vsel %vm413, %v588, 0
          %v630 = vsel %vm413, %v589, 0
          %v633 = vsel %vm413, %v590, 0
          %v636 = vsel %vm413, %v591, 0
          %v639 = vsel %vm413, %v592, 0
          %641 = vmatpush.msra.mxu0 0.0
          %642 = vmatpush.msra.mxu0 0.0
          %643 = vmatpush.msra.mxu0 0.0
          %644 = vmatpush.msra.mxu0 0.0
          %645 = vmatpush.msra.mxu0 0.0
          %646 = vmatpush.msra.mxu0 0.0
          %647 = vmatpush.msra.mxu0 0.0
          %648 = vmatpush.msra.mxu0 0.0
          %649 = vmatpush.msra.mxu0 0.0
          %650 = vmatpush.msra.mxu0 0.0
          %651 = vmatpush.msra.mxu0 0.0
          %652 = vmatpush.msra.mxu0 0.0
          %653 = vmatpush.msra.mxu0 0.0
          %654 = vmatpush.msra.mxu0 0.0
          %v655 = vand.u32 %v441, 4294901760
          %656 = vmatpush.msra.mxu0 %v655
          %v657 = vand.u32 %v438, 4294901760
          %658 = vmatpush.msra.mxu0 %v657
          %v659 = vand.u32 %v594, 4294901760
          %v660 = vsub.f32 %v594, %v659
          %v661 = vand.u32 %v660, 4294901760
          %v662 = vsub.f32 %v660, %v661
          %v663 = vand.u32 %v662, 4294901760
          %664 = vmatmul.f32.gmra.mxu0 %v663
          %v665 = vpop.f32.mrf.mxu0
          %v666 = vadd.f32 0.0, %v665
          %v667 = vand.u32 %v597, 4294901760
          %v668 = vsub.f32 %v597, %v667
          %v669 = vand.u32 %v668, 4294901760
          %v670 = vsub.f32 %v668, %v669
          %v671 = vand.u32 %v670, 4294901760
          %672 = vmatmul.f32.gmra.mxu0 %v671
          %v673 = vpop.f32.mrf.mxu0
          %v674 = vadd.f32 0.0, %v673
          %v675 = vand.u32 %v600, 4294901760
          %v676 = vsub.f32 %v600, %v675
          %v677 = vand.u32 %v676, 4294901760
          %v678 = vsub.f32 %v676, %v677
          %v679 = vand.u32 %v678, 4294901760
          %680 = vmatmul.f32.gmra.mxu0 %v679
          %v681 = vpop.f32.mrf.mxu0
          %v682 = vadd.f32 0.0, %v681
          %v683 = vand.u32 %v603, 4294901760
          %v684 = vsub.f32 %v603, %v683
          %v685 = vand.u32 %v684, 4294901760
          %v686 = vsub.f32 %v684, %v685
          %v687 = vand.u32 %v686, 4294901760
          %688 = vmatmul.f32.gmra.mxu0 %v687
          %v689 = vpop.f32.mrf.mxu0
          %v690 = vadd.f32 0.0, %v689
          %v691 = vand.u32 %v606, 4294901760
          %v692 = vsub.f32 %v606, %v691
          %v693 = vand.u32 %v692, 4294901760
          %v694 = vsub.f32 %v692, %v693
          %v695 = vand.u32 %v694, 4294901760
          %696 = vmatmul.f32.gmra.mxu0 %v695
          %v697 = vpop.f32.mrf.mxu0
          %v698 = vadd.f32 0.0, %v697
          %v699 = vand.u32 %v609, 4294901760
          %v700 = vsub.f32 %v609, %v699
          %v701 = vand.u32 %v700, 4294901760
          %v702 = vsub.f32 %v700, %v701
          %v703 = vand.u32 %v702, 4294901760
          %704 = vmatmul.f32.gmra.mxu0 %v703
          %v705 = vpop.f32.mrf.mxu0
          %v706 = vadd.f32 0.0, %v705
          %v707 = vand.u32 %v612, 4294901760
          %v708 = vsub.f32 %v612, %v707
          %v709 = vand.u32 %v708, 4294901760
          %v710 = vsub.f32 %v708, %v709
          %v711 = vand.u32 %v710, 4294901760
          %712 = vmatmul.f32.gmra.mxu0 %v711
          %v713 = vpop.f32.mrf.mxu0
          %v714 = vadd.f32 0.0, %v713
          %v715 = vand.u32 %v615, 4294901760
          %v716 = vsub.f32 %v615, %v715
          %v717 = vand.u32 %v716, 4294901760
          %v718 = vsub.f32 %v716, %v717
          %v719 = vand.u32 %v718, 4294901760
          %720 = vmatmul.f32.gmra.mxu0 %v719
          %v721 = vpop.f32.mrf.mxu0
          %v722 = vadd.f32 0.0, %v721
          %v723 = vand.u32 %v618, 4294901760
          %v724 = vsub.f32 %v618, %v723
          %v725 = vand.u32 %v724, 4294901760
          %v726 = vsub.f32 %v724, %v725
          %v727 = vand.u32 %v726, 4294901760
          %728 = vmatmul.f32.gmra.mxu0 %v727
          %v729 = vpop.f32.mrf.mxu0
          %v730 = vadd.f32 0.0, %v729
          %v731 = vand.u32 %v621, 4294901760
          %v732 = vsub.f32 %v621, %v731
          %v733 = vand.u32 %v732, 4294901760
          %v734 = vsub.f32 %v732, %v733
          %v735 = vand.u32 %v734, 4294901760
          %736 = vmatmul.f32.gmra.mxu0 %v735
          %v737 = vpop.f32.mrf.mxu0
          %v738 = vadd.f32 0.0, %v737
          %v739 = vand.u32 %v624, 4294901760
          %v740 = vsub.f32 %v624, %v739
          %v741 = vand.u32 %v740, 4294901760
          %v742 = vsub.f32 %v740, %v741
          %v743 = vand.u32 %v742, 4294901760
          %744 = vmatmul.f32.gmra.mxu0 %v743
          %v745 = vpop.f32.mrf.mxu0
          %v746 = vadd.f32 0.0, %v745
          %v747 = vand.u32 %v627, 4294901760
          %v748 = vsub.f32 %v627, %v747
          %v749 = vand.u32 %v748, 4294901760
          %v750 = vsub.f32 %v748, %v749
          %v751 = vand.u32 %v750, 4294901760
          %752 = vmatmul.f32.gmra.mxu0 %v751
          %v753 = vpop.f32.mrf.mxu0
          %v754 = vadd.f32 0.0, %v753
          %v755 = vand.u32 %v630, 4294901760
          %v756 = vsub.f32 %v630, %v755
          %v757 = vand.u32 %v756, 4294901760
          %v758 = vsub.f32 %v756, %v757
          %v759 = vand.u32 %v758, 4294901760
          %760 = vmatmul.f32.gmra.mxu0 %v759
          %v761 = vpop.f32.mrf.mxu0
          %v762 = vadd.f32 0.0, %v761
          %v763 = vand.u32 %v633, 4294901760
          %v764 = vsub.f32 %v633, %v763
          %v765 = vand.u32 %v764, 4294901760
          %v766 = vsub.f32 %v764, %v765
          %v767 = vand.u32 %v766, 4294901760
          %768 = vmatmul.f32.gmra.mxu0 %v767
          %v769 = vpop.f32.mrf.mxu0
          %v770 = vadd.f32 0.0, %v769
          %v771 = vand.u32 %v636, 4294901760
          %v772 = vsub.f32 %v636, %v771
          %v773 = vand.u32 %v772, 4294901760
          %v774 = vsub.f32 %v772, %v773
          %v775 = vand.u32 %v774, 4294901760
          %776 = vmatmul.f32.gmra.mxu0 %v775
          %v777 = vpop.f32.mrf.mxu0
          %v778 = vadd.f32 0.0, %v777
          %v779 = vand.u32 %v639, 4294901760
          %v780 = vsub.f32 %v639, %v779
          %v781 = vand.u32 %v780, 4294901760
          %v782 = vsub.f32 %v780, %v781
          %v783 = vand.u32 %v782, 4294901760
          %784 = vmatmul.f32.gmra.mxu0 %v783
          %v785 = vpop.f32.mrf.mxu0
          %v786 = vadd.f32 0.0, %v785
          %787 = vdwg.mxu0
          %788 = vmatpush.msra.mxu0 0.0
          %789 = vmatpush.msra.mxu0 0.0
          %790 = vmatpush.msra.mxu0 0.0
          %791 = vmatpush.msra.mxu0 0.0
          %792 = vmatpush.msra.mxu0 0.0
          %793 = vmatpush.msra.mxu0 0.0
          %794 = vmatpush.msra.mxu0 0.0
          %795 = vmatpush.msra.mxu0 0.0
          %796 = vmatpush.msra.mxu0 0.0
          %797 = vmatpush.msra.mxu0 0.0
          %798 = vmatpush.msra.mxu0 0.0
          %799 = vmatpush.msra.mxu0 0.0
          %800 = vmatpush.msra.mxu0 0.0
          %801 = vmatpush.msra.mxu0 0.0
          %v802 = vand.u32 %v441, 4294901760
          %v803 = vsub.f32 %v441, %v802
          %v804 = vand.u32 %v803, 4294901760
          %v805 = vsub.f32 %v803, %v804
          %v806 = vand.u32 %v805, 4294901760
          %807 = vmatpush.msra.mxu0 %v806
          %v808 = vand.u32 %v438, 4294901760
          %v809 = vsub.f32 %v438, %v808
          %v810 = vand.u32 %v809, 4294901760
          %v811 = vsub.f32 %v809, %v810
          %v812 = vand.u32 %v811, 4294901760
          %813 = vmatpush.msra.mxu0 %v812
          %v814 = vand.u32 %v594, 4294901760
          %815 = vmatmul.f32.gmra.mxu0 %v814
          %v816 = vpop.f32.mrf.mxu0
          %v817 = vadd.f32 %v666, %v816
          %v818 = vand.u32 %v597, 4294901760
          %819 = vmatmul.f32.gmra.mxu0 %v818
          %v820 = vpop.f32.mrf.mxu0
          %v821 = vadd.f32 %v674, %v820
          %v822 = vand.u32 %v600, 4294901760
          %823 = vmatmul.f32.gmra.mxu0 %v822
          %v824 = vpop.f32.mrf.mxu0
          %v825 = vadd.f32 %v682, %v824
          %v826 = vand.u32 %v603, 4294901760
          %827 = vmatmul.f32.gmra.mxu0 %v826
          %v828 = vpop.f32.mrf.mxu0
          %v829 = vadd.f32 %v690, %v828
          %v830 = vand.u32 %v606, 4294901760
          %831 = vmatmul.f32.gmra.mxu0 %v830
          %v832 = vpop.f32.mrf.mxu0
          %v833 = vadd.f32 %v698, %v832
          %v834 = vand.u32 %v609, 4294901760
          %835 = vmatmul.f32.gmra.mxu0 %v834
          %v836 = vpop.f32.mrf.mxu0
          %v837 = vadd.f32 %v706, %v836
          %v838 = vand.u32 %v612, 4294901760
          %839 = vmatmul.f32.gmra.mxu0 %v838
          %v840 = vpop.f32.mrf.mxu0
          %v841 = vadd.f32 %v714, %v840
          %v842 = vand.u32 %v615, 4294901760
          %843 = vmatmul.f32.gmra.mxu0 %v842
          %v844 = vpop.f32.mrf.mxu0
          %v845 = vadd.f32 %v722, %v844
          %v846 = vand.u32 %v618, 4294901760
          %847 = vmatmul.f32.gmra.mxu0 %v846
          %v848 = vpop.f32.mrf.mxu0
          %v849 = vadd.f32 %v730, %v848
          %v850 = vand.u32 %v621, 4294901760
          %851 = vmatmul.f32.gmra.mxu0 %v850
          %v852 = vpop.f32.mrf.mxu0
          %v853 = vadd.f32 %v738, %v852
          %v854 = vand.u32 %v624, 4294901760
          %855 = vmatmul.f32.gmra.mxu0 %v854
          %v856 = vpop.f32.mrf.mxu0
          %v857 = vadd.f32 %v746, %v856
          %v858 = vand.u32 %v627, 4294901760
          %859 = vmatmul.f32.gmra.mxu0 %v858
          %v860 = vpop.f32.mrf.mxu0
          %v861 = vadd.f32 %v754, %v860
          %v862 = vand.u32 %v630, 4294901760
          %863 = vmatmul.f32.gmra.mxu0 %v862
          %v864 = vpop.f32.mrf.mxu0
          %v865 = vadd.f32 %v762, %v864
          %v866 = vand.u32 %v633, 4294901760
          %867 = vmatmul.f32.gmra.mxu0 %v866
          %v868 = vpop.f32.mrf.mxu0
          %v869 = vadd.f32 %v770, %v868
          %v870 = vand.u32 %v636, 4294901760
          %871 = vmatmul.f32.gmra.mxu0 %v870
          %v872 = vpop.f32.mrf.mxu0
          %v873 = vadd.f32 %v778, %v872
          %v874 = vand.u32 %v639, 4294901760
          %875 = vmatmul.f32.gmra.mxu0 %v874
          %v876 = vpop.f32.mrf.mxu0
          %v877 = vadd.f32 %v786, %v876
          %878 = vdwg.mxu0
          %879 = vmatpush.msra.mxu0 0.0
          %880 = vmatpush.msra.mxu0 0.0
          %881 = vmatpush.msra.mxu0 0.0
          %882 = vmatpush.msra.mxu0 0.0
          %883 = vmatpush.msra.mxu0 0.0
          %884 = vmatpush.msra.mxu0 0.0
          %885 = vmatpush.msra.mxu0 0.0
          %886 = vmatpush.msra.mxu0 0.0
          %887 = vmatpush.msra.mxu0 0.0
          %888 = vmatpush.msra.mxu0 0.0
          %889 = vmatpush.msra.mxu0 0.0
          %890 = vmatpush.msra.mxu0 0.0
          %891 = vmatpush.msra.mxu0 0.0
          %892 = vmatpush.msra.mxu0 0.0
          %v893 = vand.u32 %v441, 4294901760
          %v894 = vsub.f32 %v441, %v893
          %895 = vmatpush.msra.mxu0 %v894
          %v896 = vand.u32 %v438, 4294901760
          %v897 = vsub.f32 %v438, %v896
          %898 = vmatpush.msra.mxu0 %v897
          %v899 = vand.u32 %v594, 4294901760
          %v900 = vsub.f32 %v594, %v899
          %901 = vmatmul.f32.gmra.mxu0 %v900
          %v902 = vpop.f32.mrf.mxu0
          %v903 = vadd.f32 %v817, %v902
          %v904 = vand.u32 %v597, 4294901760
          %v905 = vsub.f32 %v597, %v904
          %906 = vmatmul.f32.gmra.mxu0 %v905
          %v907 = vpop.f32.mrf.mxu0
          %v908 = vadd.f32 %v821, %v907
          %v909 = vand.u32 %v600, 4294901760
          %v910 = vsub.f32 %v600, %v909
          %911 = vmatmul.f32.gmra.mxu0 %v910
          %v912 = vpop.f32.mrf.mxu0
          %v913 = vadd.f32 %v825, %v912
          %v914 = vand.u32 %v603, 4294901760
          %v915 = vsub.f32 %v603, %v914
          %916 = vmatmul.f32.gmra.mxu0 %v915
          %v917 = vpop.f32.mrf.mxu0
          %v918 = vadd.f32 %v829, %v917
          %v919 = vand.u32 %v606, 4294901760
          %v920 = vsub.f32 %v606, %v919
          %921 = vmatmul.f32.gmra.mxu0 %v920
          %v922 = vpop.f32.mrf.mxu0
          %v923 = vadd.f32 %v833, %v922
          %v924 = vand.u32 %v609, 4294901760
          %v925 = vsub.f32 %v609, %v924
          %926 = vmatmul.f32.gmra.mxu0 %v925
          %v927 = vpop.f32.mrf.mxu0
          %v928 = vadd.f32 %v837, %v927
          %v929 = vand.u32 %v612, 4294901760
          %v930 = vsub.f32 %v612, %v929
          %931 = vmatmul.f32.gmra.mxu0 %v930
          %v932 = vpop.f32.mrf.mxu0
          %v933 = vadd.f32 %v841, %v932
          %v934 = vand.u32 %v615, 4294901760
          %v935 = vsub.f32 %v615, %v934
          %936 = vmatmul.f32.gmra.mxu0 %v935
          %v937 = vpop.f32.mrf.mxu0
          %v938 = vadd.f32 %v845, %v937
          %v939 = vand.u32 %v618, 4294901760
          %v940 = vsub.f32 %v618, %v939
          %941 = vmatmul.f32.gmra.mxu0 %v940
          %v942 = vpop.f32.mrf.mxu0
          %v943 = vadd.f32 %v849, %v942
          %v944 = vand.u32 %v621, 4294901760
          %v945 = vsub.f32 %v621, %v944
          %946 = vmatmul.f32.gmra.mxu0 %v945
          %v947 = vpop.f32.mrf.mxu0
          %v948 = vadd.f32 %v853, %v947
          %v949 = vand.u32 %v624, 4294901760
          %v950 = vsub.f32 %v624, %v949
          %951 = vmatmul.f32.gmra.mxu0 %v950
          %v952 = vpop.f32.mrf.mxu0
          %v953 = vadd.f32 %v857, %v952
          %v954 = vand.u32 %v627, 4294901760
          %v955 = vsub.f32 %v627, %v954
          %956 = vmatmul.f32.gmra.mxu0 %v955
          %v957 = vpop.f32.mrf.mxu0
          %v958 = vadd.f32 %v861, %v957
          %v959 = vand.u32 %v630, 4294901760
          %v960 = vsub.f32 %v630, %v959
          %961 = vmatmul.f32.gmra.mxu0 %v960
          %v962 = vpop.f32.mrf.mxu0
          %v963 = vadd.f32 %v865, %v962
          %v964 = vand.u32 %v633, 4294901760
          %v965 = vsub.f32 %v633, %v964
          %966 = vmatmul.f32.gmra.mxu0 %v965
          %v967 = vpop.f32.mrf.mxu0
          %v968 = vadd.f32 %v869, %v967
          %v969 = vand.u32 %v636, 4294901760
          %v970 = vsub.f32 %v636, %v969
          %971 = vmatmul.f32.gmra.mxu0 %v970
          %v972 = vpop.f32.mrf.mxu0
          %v973 = vadd.f32 %v873, %v972
          %v974 = vand.u32 %v639, 4294901760
          %v975 = vsub.f32 %v639, %v974
          %976 = vmatmul.f32.gmra.mxu0 %v975
          %v977 = vpop.f32.mrf.mxu0
          %v978 = vadd.f32 %v877, %v977
          %979 = vdwg.mxu0
          %980 = vmatpush.msra.mxu0 0.0
          %981 = vmatpush.msra.mxu0 0.0
          %982 = vmatpush.msra.mxu0 0.0
          %983 = vmatpush.msra.mxu0 0.0
          %984 = vmatpush.msra.mxu0 0.0
          %985 = vmatpush.msra.mxu0 0.0
          %986 = vmatpush.msra.mxu0 0.0
          %987 = vmatpush.msra.mxu0 0.0
          %988 = vmatpush.msra.mxu0 0.0
          %989 = vmatpush.msra.mxu0 0.0
          %990 = vmatpush.msra.mxu0 0.0
          %991 = vmatpush.msra.mxu0 0.0
          %992 = vmatpush.msra.mxu0 0.0
          %993 = vmatpush.msra.mxu0 0.0
          %v994 = vand.u32 %v441, 4294901760
          %995 = vmatpush.msra.mxu0 %v994
          %v996 = vand.u32 %v438, 4294901760
          %997 = vmatpush.msra.mxu0 %v996
          %v998 = vand.u32 %v594, 4294901760
          %v999 = vsub.f32 %v594, %v998
          %v1000 = vand.u32 %v999, 4294901760
          %1001 = vmatmul.f32.gmra.mxu0 %v1000
          %v1002 = vpop.f32.mrf.mxu0
          %v1003 = vadd.f32 %v903, %v1002
          %v1004 = vand.u32 %v597, 4294901760
          %v1005 = vsub.f32 %v597, %v1004
          %v1006 = vand.u32 %v1005, 4294901760
          %1007 = vmatmul.f32.gmra.mxu0 %v1006
          %v1008 = vpop.f32.mrf.mxu0
          %v1009 = vadd.f32 %v908, %v1008
          %v1010 = vand.u32 %v600, 4294901760
          %v1011 = vsub.f32 %v600, %v1010
          %v1012 = vand.u32 %v1011, 4294901760
          %1013 = vmatmul.f32.gmra.mxu0 %v1012
          %v1014 = vpop.f32.mrf.mxu0
          %v1015 = vadd.f32 %v913, %v1014
          %v1016 = vand.u32 %v603, 4294901760
          %v1017 = vsub.f32 %v603, %v1016
          %v1018 = vand.u32 %v1017, 4294901760
          %1019 = vmatmul.f32.gmra.mxu0 %v1018
          %v1020 = vpop.f32.mrf.mxu0
          %v1021 = vadd.f32 %v918, %v1020
          %v1022 = vand.u32 %v606, 4294901760
          %v1023 = vsub.f32 %v606, %v1022
          %v1024 = vand.u32 %v1023, 4294901760
          %1025 = vmatmul.f32.gmra.mxu0 %v1024
          %v1026 = vpop.f32.mrf.mxu0
          %v1027 = vadd.f32 %v923, %v1026
          %v1028 = vand.u32 %v609, 4294901760
          %v1029 = vsub.f32 %v609, %v1028
          %v1030 = vand.u32 %v1029, 4294901760
          %1031 = vmatmul.f32.gmra.mxu0 %v1030
          %v1032 = vpop.f32.mrf.mxu0
          %v1033 = vadd.f32 %v928, %v1032
          %v1034 = vand.u32 %v612, 4294901760
          %v1035 = vsub.f32 %v612, %v1034
          %v1036 = vand.u32 %v1035, 4294901760
          %1037 = vmatmul.f32.gmra.mxu0 %v1036
          %v1038 = vpop.f32.mrf.mxu0
          %v1039 = vadd.f32 %v933, %v1038
          %v1040 = vand.u32 %v615, 4294901760
          %v1041 = vsub.f32 %v615, %v1040
          %v1042 = vand.u32 %v1041, 4294901760
          %1043 = vmatmul.f32.gmra.mxu0 %v1042
          %v1044 = vpop.f32.mrf.mxu0
          %v1045 = vadd.f32 %v938, %v1044
          %v1046 = vand.u32 %v618, 4294901760
          %v1047 = vsub.f32 %v618, %v1046
          %v1048 = vand.u32 %v1047, 4294901760
          %1049 = vmatmul.f32.gmra.mxu0 %v1048
          %v1050 = vpop.f32.mrf.mxu0
          %v1051 = vadd.f32 %v943, %v1050
          %v1052 = vand.u32 %v621, 4294901760
          %v1053 = vsub.f32 %v621, %v1052
          %v1054 = vand.u32 %v1053, 4294901760
          %1055 = vmatmul.f32.gmra.mxu0 %v1054
          %v1056 = vpop.f32.mrf.mxu0
          %v1057 = vadd.f32 %v948, %v1056
          %v1058 = vand.u32 %v624, 4294901760
          %v1059 = vsub.f32 %v624, %v1058
          %v1060 = vand.u32 %v1059, 4294901760
          %1061 = vmatmul.f32.gmra.mxu0 %v1060
          %v1062 = vpop.f32.mrf.mxu0
          %v1063 = vadd.f32 %v953, %v1062
          %v1064 = vand.u32 %v627, 4294901760
          %v1065 = vsub.f32 %v627, %v1064
          %v1066 = vand.u32 %v1065, 4294901760
          %1067 = vmatmul.f32.gmra.mxu0 %v1066
          %v1068 = vpop.f32.mrf.mxu0
          %v1069 = vadd.f32 %v958, %v1068
          %v1070 = vand.u32 %v630, 4294901760
          %v1071 = vsub.f32 %v630, %v1070
          %v1072 = vand.u32 %v1071, 4294901760
          %1073 = vmatmul.f32.gmra.mxu0 %v1072
          %v1074 = vpop.f32.mrf.mxu0
          %v1075 = vadd.f32 %v963, %v1074
          %v1076 = vand.u32 %v633, 4294901760
          %v1077 = vsub.f32 %v633, %v1076
          %v1078 = vand.u32 %v1077, 4294901760
          %1079 = vmatmul.f32.gmra.mxu0 %v1078
          %v1080 = vpop.f32.mrf.mxu0
          %v1081 = vadd.f32 %v968, %v1080
          %v1082 = vand.u32 %v636, 4294901760
          %v1083 = vsub.f32 %v636, %v1082
          %v1084 = vand.u32 %v1083, 4294901760
          %1085 = vmatmul.f32.gmra.mxu0 %v1084
          %v1086 = vpop.f32.mrf.mxu0
          %v1087 = vadd.f32 %v973, %v1086
          %v1088 = vand.u32 %v639, 4294901760
          %v1089 = vsub.f32 %v639, %v1088
          %v1090 = vand.u32 %v1089, 4294901760
          %1091 = vmatmul.f32.gmra.mxu0 %v1090
          %v1092 = vpop.f32.mrf.mxu0
          %v1093 = vadd.f32 %v978, %v1092
          %1094 = vdwg.mxu0
          %1095 = vmatpush.msra.mxu0 0.0
          %1096 = vmatpush.msra.mxu0 0.0
          %1097 = vmatpush.msra.mxu0 0.0
          %1098 = vmatpush.msra.mxu0 0.0
          %1099 = vmatpush.msra.mxu0 0.0
          %1100 = vmatpush.msra.mxu0 0.0
          %1101 = vmatpush.msra.mxu0 0.0
          %1102 = vmatpush.msra.mxu0 0.0
          %1103 = vmatpush.msra.mxu0 0.0
          %1104 = vmatpush.msra.mxu0 0.0
          %1105 = vmatpush.msra.mxu0 0.0
          %1106 = vmatpush.msra.mxu0 0.0
          %1107 = vmatpush.msra.mxu0 0.0
          %1108 = vmatpush.msra.mxu0 0.0
          %v1109 = vand.u32 %v441, 4294901760
          %v1110 = vsub.f32 %v441, %v1109
          %v1111 = vand.u32 %v1110, 4294901760
          %1112 = vmatpush.msra.mxu0 %v1111
          %v1113 = vand.u32 %v438, 4294901760
          %v1114 = vsub.f32 %v438, %v1113
          %v1115 = vand.u32 %v1114, 4294901760
          %1116 = vmatpush.msra.mxu0 %v1115
          %v1117 = vand.u32 %v594, 4294901760
          %1118 = vmatmul.f32.gmra.mxu0 %v1117
          %v1119 = vpop.f32.mrf.mxu0
          %v1120 = vadd.f32 %v1003, %v1119
          %v1121 = vand.u32 %v597, 4294901760
          %1122 = vmatmul.f32.gmra.mxu0 %v1121
          %v1123 = vpop.f32.mrf.mxu0
          %v1124 = vadd.f32 %v1009, %v1123
          %v1125 = vand.u32 %v600, 4294901760
          %1126 = vmatmul.f32.gmra.mxu0 %v1125
          %v1127 = vpop.f32.mrf.mxu0
          %v1128 = vadd.f32 %v1015, %v1127
          %v1129 = vand.u32 %v603, 4294901760
          %1130 = vmatmul.f32.gmra.mxu0 %v1129
          %v1131 = vpop.f32.mrf.mxu0
          %v1132 = vadd.f32 %v1021, %v1131
          %v1133 = vand.u32 %v606, 4294901760
          %1134 = vmatmul.f32.gmra.mxu0 %v1133
          %v1135 = vpop.f32.mrf.mxu0
          %v1136 = vadd.f32 %v1027, %v1135
          %v1137 = vand.u32 %v609, 4294901760
          %1138 = vmatmul.f32.gmra.mxu0 %v1137
          %v1139 = vpop.f32.mrf.mxu0
          %v1140 = vadd.f32 %v1033, %v1139
          %v1141 = vand.u32 %v612, 4294901760
          %1142 = vmatmul.f32.gmra.mxu0 %v1141
          %v1143 = vpop.f32.mrf.mxu0
          %v1144 = vadd.f32 %v1039, %v1143
          %v1145 = vand.u32 %v615, 4294901760
          %1146 = vmatmul.f32.gmra.mxu0 %v1145
          %v1147 = vpop.f32.mrf.mxu0
          %v1148 = vadd.f32 %v1045, %v1147
          %v1149 = vand.u32 %v618, 4294901760
          %1150 = vmatmul.f32.gmra.mxu0 %v1149
          %v1151 = vpop.f32.mrf.mxu0
          %v1152 = vadd.f32 %v1051, %v1151
          %v1153 = vand.u32 %v621, 4294901760
          %1154 = vmatmul.f32.gmra.mxu0 %v1153
          %v1155 = vpop.f32.mrf.mxu0
          %v1156 = vadd.f32 %v1057, %v1155
          %v1157 = vand.u32 %v624, 4294901760
          %1158 = vmatmul.f32.gmra.mxu0 %v1157
          %v1159 = vpop.f32.mrf.mxu0
          %v1160 = vadd.f32 %v1063, %v1159
          %v1161 = vand.u32 %v627, 4294901760
          %1162 = vmatmul.f32.gmra.mxu0 %v1161
          %v1163 = vpop.f32.mrf.mxu0
          %v1164 = vadd.f32 %v1069, %v1163
          %v1165 = vand.u32 %v630, 4294901760
          %1166 = vmatmul.f32.gmra.mxu0 %v1165
          %v1167 = vpop.f32.mrf.mxu0
          %v1168 = vadd.f32 %v1075, %v1167
          %v1169 = vand.u32 %v633, 4294901760
          %1170 = vmatmul.f32.gmra.mxu0 %v1169
          %v1171 = vpop.f32.mrf.mxu0
          %v1172 = vadd.f32 %v1081, %v1171
          %v1173 = vand.u32 %v636, 4294901760
          %1174 = vmatmul.f32.gmra.mxu0 %v1173
          %v1175 = vpop.f32.mrf.mxu0
          %v1176 = vadd.f32 %v1087, %v1175
          %v1177 = vand.u32 %v639, 4294901760
          %1178 = vmatmul.f32.gmra.mxu0 %v1177
          %v1179 = vpop.f32.mrf.mxu0
          %v1180 = vadd.f32 %v1093, %v1179
          %1181 = vdwg.mxu0
          %1182 = vmatpush.msra.mxu0 0.0
          %1183 = vmatpush.msra.mxu0 0.0
          %1184 = vmatpush.msra.mxu0 0.0
          %1185 = vmatpush.msra.mxu0 0.0
          %1186 = vmatpush.msra.mxu0 0.0
          %1187 = vmatpush.msra.mxu0 0.0
          %1188 = vmatpush.msra.mxu0 0.0
          %1189 = vmatpush.msra.mxu0 0.0
          %1190 = vmatpush.msra.mxu0 0.0
          %1191 = vmatpush.msra.mxu0 0.0
          %1192 = vmatpush.msra.mxu0 0.0
          %1193 = vmatpush.msra.mxu0 0.0
          %1194 = vmatpush.msra.mxu0 0.0
          %1195 = vmatpush.msra.mxu0 0.0
          %v1196 = vand.u32 %v441, 4294901760
          %1197 = vmatpush.msra.mxu0 %v1196
          %v1198 = vand.u32 %v438, 4294901760
          %1199 = vmatpush.msra.mxu0 %v1198
          %v1200 = vand.u32 %v594, 4294901760
          %1201 = vmatmul.f32.gmra.mxu0 %v1200
          %v1202 = vpop.f32.mrf.mxu0
          %v1203 = vadd.f32 %v1120, %v1202
          %v1204 = vand.u32 %v597, 4294901760
          %1205 = vmatmul.f32.gmra.mxu0 %v1204
          %v1206 = vpop.f32.mrf.mxu0
          %v1207 = vadd.f32 %v1124, %v1206
          %v1208 = vand.u32 %v600, 4294901760
          %1209 = vmatmul.f32.gmra.mxu0 %v1208
          %v1210 = vpop.f32.mrf.mxu0
          %v1211 = vadd.f32 %v1128, %v1210
          %v1212 = vand.u32 %v603, 4294901760
          %1213 = vmatmul.f32.gmra.mxu0 %v1212
          %v1214 = vpop.f32.mrf.mxu0
          %v1215 = vadd.f32 %v1132, %v1214
          %v1216 = vand.u32 %v606, 4294901760
          %1217 = vmatmul.f32.gmra.mxu0 %v1216
          %v1218 = vpop.f32.mrf.mxu0
          %v1219 = vadd.f32 %v1136, %v1218
          %v1220 = vand.u32 %v609, 4294901760
          %1221 = vmatmul.f32.gmra.mxu0 %v1220
          %v1222 = vpop.f32.mrf.mxu0
          %v1223 = vadd.f32 %v1140, %v1222
          %v1224 = vand.u32 %v612, 4294901760
          %1225 = vmatmul.f32.gmra.mxu0 %v1224
          %v1226 = vpop.f32.mrf.mxu0
          %v1227 = vadd.f32 %v1144, %v1226
          %v1228 = vand.u32 %v615, 4294901760
          %1229 = vmatmul.f32.gmra.mxu0 %v1228
          %v1230 = vpop.f32.mrf.mxu0
          %v1231 = vadd.f32 %v1148, %v1230
          %v1232 = vand.u32 %v618, 4294901760
          %1233 = vmatmul.f32.gmra.mxu0 %v1232
          %v1234 = vpop.f32.mrf.mxu0
          %v1235 = vadd.f32 %v1152, %v1234
          %v1236 = vand.u32 %v621, 4294901760
          %1237 = vmatmul.f32.gmra.mxu0 %v1236
          %v1238 = vpop.f32.mrf.mxu0
          %v1239 = vadd.f32 %v1156, %v1238
          %v1240 = vand.u32 %v624, 4294901760
          %1241 = vmatmul.f32.gmra.mxu0 %v1240
          %v1242 = vpop.f32.mrf.mxu0
          %v1243 = vadd.f32 %v1160, %v1242
          %v1244 = vand.u32 %v627, 4294901760
          %1245 = vmatmul.f32.gmra.mxu0 %v1244
          %v1246 = vpop.f32.mrf.mxu0
          %v1247 = vadd.f32 %v1164, %v1246
          %v1248 = vand.u32 %v630, 4294901760
          %1249 = vmatmul.f32.gmra.mxu0 %v1248
          %v1250 = vpop.f32.mrf.mxu0
          %v1251 = vadd.f32 %v1168, %v1250
          %v1252 = vand.u32 %v633, 4294901760
          %1253 = vmatmul.f32.gmra.mxu0 %v1252
          %v1254 = vpop.f32.mrf.mxu0
          %v1255 = vadd.f32 %v1172, %v1254
          %v1256 = vand.u32 %v636, 4294901760
          %1257 = vmatmul.f32.gmra.mxu0 %v1256
          %v1258 = vpop.f32.mrf.mxu0
          %v1259 = vadd.f32 %v1176, %v1258
          %v1260 = vand.u32 %v639, 4294901760
          %1261 = vmatmul.f32.gmra.mxu0 %v1260
          %v1262 = vpop.f32.mrf.mxu0
          %v1263 = vadd.f32 %v1180, %v1262
          %1264 = vdwg.mxu0
          %v1265 = vmul.f32 %v1203, 0.25
          %v1266 = vmul.f32 %v1207, 0.25
          %v1267 = vmul.f32 %v1211, 0.25
          %v1268 = vmul.f32 %v1215, 0.25
          %v1269 = vmul.f32 %v1219, 0.25
          %v1270 = vmul.f32 %v1223, 0.25
          %v1271 = vmul.f32 %v1227, 0.25
          %v1272 = vmul.f32 %v1231, 0.25
          %v1273 = vmul.f32 %v1235, 0.25
          %v1274 = vmul.f32 %v1239, 0.25
          %v1275 = vmul.f32 %v1243, 0.25
          %v1276 = vmul.f32 %v1247, 0.25
          %v1277 = vmul.f32 %v1251, 0.25
          %v1278 = vmul.f32 %v1255, 0.25
          %v1279 = vmul.f32 %v1259, 0.25
          %v1280 = vmul.f32 %v1263, 0.25
          %1281 = vst.msk [vmem:[#allocation2] sm:$0xff] %vm443, %v1265
          %1282 = vst.msk [vmem:[#allocation2 + $0x8] sm:$0xff] %vm443, %v1266
          %1283 = vst.msk [vmem:[#allocation2 + $0x10] sm:$0xff] %vm443, %v1267
          %1284 = vst.msk [vmem:[#allocation2 + $0x18] sm:$0xff] %vm443, %v1268
          %1285 = vst.msk [vmem:[#allocation2 + $0x20] sm:$0xff] %vm443, %v1269
          %1286 = vst.msk [vmem:[#allocation2 + $0x28] sm:$0xff] %vm443, %v1270
          %1287 = vst.msk [vmem:[#allocation2 + $0x30] sm:$0xff] %vm443, %v1271
          %1288 = vst.msk [vmem:[#allocation2 + $0x38] sm:$0xff] %vm443, %v1272
          %1289 = vst.msk [vmem:[#allocation2 + $0x40] sm:$0xff] %vm443, %v1273
          %1290 = vst.msk [vmem:[#allocation2 + $0x48] sm:$0xff] %vm443, %v1274
          %1291 = vst.msk [vmem:[#allocation2 + $0x50] sm:$0xff] %vm443, %v1275
          %1292 = vst.msk [vmem:[#allocation2 + $0x58] sm:$0xff] %vm443, %v1276
          %1293 = vst.msk [vmem:[#allocation2 + $0x60] sm:$0xff] %vm443, %v1277
          %1294 = vst.msk [vmem:[#allocation2 + $0x68] sm:$0xff] %vm443, %v1278
          %1295 = vst.msk [vmem:[#allocation2 + $0x70] sm:$0xff] %vm443, %v1279
          %1296 = vst.msk [vmem:[#allocation2 + $0x78] sm:$0xff] %vm443, %v1280
          %vm1297 = vcmask 257024
          %1298 = vst.msk [vmem:[%s393] sm:$0xf] %vm1297, %v1265
          %v1299 = vmul.f32 %v1265, %v1265
          %v1300 = vmul.f32 %v1266, %v1266
          %v1301 = vmul.f32 %v1267, %v1267
          %v1302 = vmul.f32 %v1268, %v1268
          %v1303 = vmul.f32 %v1269, %v1269
          %v1304 = vmul.f32 %v1270, %v1270
          %v1305 = vmul.f32 %v1271, %v1271
          %v1306 = vmul.f32 %v1272, %v1272
          %v1307 = vmul.f32 %v1273, %v1273
          %v1308 = vmul.f32 %v1274, %v1274
          %v1309 = vmul.f32 %v1275, %v1275
          %v1310 = vmul.f32 %v1276, %v1276
          %v1311 = vmul.f32 %v1277, %v1277
          %v1312 = vmul.f32 %v1278, %v1278
          %v1313 = vmul.f32 %v1279, %v1279
          %v1314 = vmul.f32 %v1280, %v1280
          %v1316 = vsel %vm443, 1.0, 0
          %v1319 = vsel %vm443, %v1299, 0
          %v1322 = vsel %vm443, %v1300, 0
          %v1325 = vsel %vm443, %v1301, 0
          %v1328 = vsel %vm443, %v1302, 0
          %v1331 = vsel %vm443, %v1303, 0
          %v1334 = vsel %vm443, %v1304, 0
          %v1337 = vsel %vm443, %v1305, 0
          %v1340 = vsel %vm443, %v1306, 0
          %v1343 = vsel %vm443, %v1307, 0
          %v1346 = vsel %vm443, %v1308, 0
          %v1349 = vsel %vm443, %v1309, 0
          %v1352 = vsel %vm443, %v1310, 0
          %v1355 = vsel %vm443, %v1311, 0
          %v1358 = vsel %vm443, %v1312, 0
          %v1361 = vsel %vm443, %v1313, 0
          %v1364 = vsel %vm443, %v1314, 0
          %v1366 = vand.u32 %v1364, 4294901760
          %1367 = vmatpush.xpose.msra.mxu0 %v1366
          %v1368 = vand.u32 %v1361, 4294901760
          %1369 = vmatpush.xpose.msra.mxu0 %v1368
          %v1370 = vand.u32 %v1358, 4294901760
          %1371 = vmatpush.xpose.msra.mxu0 %v1370
          %v1372 = vand.u32 %v1355, 4294901760
          %1373 = vmatpush.xpose.msra.mxu0 %v1372
          %v1374 = vand.u32 %v1352, 4294901760
          %1375 = vmatpush.xpose.msra.mxu0 %v1374
          %v1376 = vand.u32 %v1349, 4294901760
          %1377 = vmatpush.xpose.msra.mxu0 %v1376
          %v1378 = vand.u32 %v1346, 4294901760
          %1379 = vmatpush.xpose.msra.mxu0 %v1378
          %v1380 = vand.u32 %v1343, 4294901760
          %1381 = vmatpush.xpose.msra.mxu0 %v1380
          %v1382 = vand.u32 %v1340, 4294901760
          %1383 = vmatpush.xpose.msra.mxu0 %v1382
          %v1384 = vand.u32 %v1337, 4294901760
          %1385 = vmatpush.xpose.msra.mxu0 %v1384
          %v1386 = vand.u32 %v1334, 4294901760
          %1387 = vmatpush.xpose.msra.mxu0 %v1386
          %v1388 = vand.u32 %v1331, 4294901760
          %1389 = vmatpush.xpose.msra.mxu0 %v1388
          %v1390 = vand.u32 %v1328, 4294901760
          %1391 = vmatpush.xpose.msra.mxu0 %v1390
          %v1392 = vand.u32 %v1325, 4294901760
          %1393 = vmatpush.xpose.msra.mxu0 %v1392
          %v1394 = vand.u32 %v1322, 4294901760
          %1395 = vmatpush.xpose.msra.mxu0 %v1394
          %v1396 = vand.u32 %v1319, 4294901760
          %1397 = vmatpush.xpose.msra.mxu0 %v1396
          %v1398 = vand.u32 %v1316, 4294901760
          %v1399 = vsub.f32 %v1316, %v1398
          %v1400 = vand.u32 %v1399, 4294901760
          %v1401 = vsub.f32 %v1399, %v1400
          %v1402 = vand.u32 %v1401, 4294901760
          %1403 = vmatmul.f32.gmra.mxu0 %v1402
          %v1404 = vpop.f32.mrf.mxu0
          %v1405 = vadd.f32 0.0, %v1404
          %1406 = vdwg.mxu0
          %v1407 = vand.u32 %v1364, 4294901760
          %v1408 = vsub.f32 %v1364, %v1407
          %v1409 = vand.u32 %v1408, 4294901760
          %v1410 = vsub.f32 %v1408, %v1409
          %v1411 = vand.u32 %v1410, 4294901760
          %1412 = vmatpush.xpose.msra.mxu0 %v1411
          %v1413 = vand.u32 %v1361, 4294901760
          %v1414 = vsub.f32 %v1361, %v1413
          %v1415 = vand.u32 %v1414, 4294901760
          %v1416 = vsub.f32 %v1414, %v1415
          %v1417 = vand.u32 %v1416, 4294901760
          %1418 = vmatpush.xpose.msra.mxu0 %v1417
          %v1419 = vand.u32 %v1358, 4294901760
          %v1420 = vsub.f32 %v1358, %v1419
          %v1421 = vand.u32 %v1420, 4294901760
          %v1422 = vsub.f32 %v1420, %v1421
          %v1423 = vand.u32 %v1422, 4294901760
          %1424 = vmatpush.xpose.msra.mxu0 %v1423
          %v1425 = vand.u32 %v1355, 4294901760
          %v1426 = vsub.f32 %v1355, %v1425
          %v1427 = vand.u32 %v1426, 4294901760
          %v1428 = vsub.f32 %v1426, %v1427
          %v1429 = vand.u32 %v1428, 4294901760
          %1430 = vmatpush.xpose.msra.mxu0 %v1429
          %v1431 = vand.u32 %v1352, 4294901760
          %v1432 = vsub.f32 %v1352, %v1431
          %v1433 = vand.u32 %v1432, 4294901760
          %v1434 = vsub.f32 %v1432, %v1433
          %v1435 = vand.u32 %v1434, 4294901760
          %1436 = vmatpush.xpose.msra.mxu0 %v1435
          %v1437 = vand.u32 %v1349, 4294901760
          %v1438 = vsub.f32 %v1349, %v1437
          %v1439 = vand.u32 %v1438, 4294901760
          %v1440 = vsub.f32 %v1438, %v1439
          %v1441 = vand.u32 %v1440, 4294901760
          %1442 = vmatpush.xpose.msra.mxu0 %v1441
          %v1443 = vand.u32 %v1346, 4294901760
          %v1444 = vsub.f32 %v1346, %v1443
          %v1445 = vand.u32 %v1444, 4294901760
          %v1446 = vsub.f32 %v1444, %v1445
          %v1447 = vand.u32 %v1446, 4294901760
          %1448 = vmatpush.xpose.msra.mxu0 %v1447
          %v1449 = vand.u32 %v1343, 4294901760
          %v1450 = vsub.f32 %v1343, %v1449
          %v1451 = vand.u32 %v1450, 4294901760
          %v1452 = vsub.f32 %v1450, %v1451
          %v1453 = vand.u32 %v1452, 4294901760
          %1454 = vmatpush.xpose.msra.mxu0 %v1453
          %v1455 = vand.u32 %v1340, 4294901760
          %v1456 = vsub.f32 %v1340, %v1455
          %v1457 = vand.u32 %v1456, 4294901760
          %v1458 = vsub.f32 %v1456, %v1457
          %v1459 = vand.u32 %v1458, 4294901760
          %1460 = vmatpush.xpose.msra.mxu0 %v1459
          %v1461 = vand.u32 %v1337, 4294901760
          %v1462 = vsub.f32 %v1337, %v1461
          %v1463 = vand.u32 %v1462, 4294901760
          %v1464 = vsub.f32 %v1462, %v1463
          %v1465 = vand.u32 %v1464, 4294901760
          %1466 = vmatpush.xpose.msra.mxu0 %v1465
          %v1467 = vand.u32 %v1334, 4294901760
          %v1468 = vsub.f32 %v1334, %v1467
          %v1469 = vand.u32 %v1468, 4294901760
          %v1470 = vsub.f32 %v1468, %v1469
          %v1471 = vand.u32 %v1470, 4294901760
          %1472 = vmatpush.xpose.msra.mxu0 %v1471
          %v1473 = vand.u32 %v1331, 4294901760
          %v1474 = vsub.f32 %v1331, %v1473
          %v1475 = vand.u32 %v1474, 4294901760
          %v1476 = vsub.f32 %v1474, %v1475
          %v1477 = vand.u32 %v1476, 4294901760
          %1478 = vmatpush.xpose.msra.mxu0 %v1477
          %v1479 = vand.u32 %v1328, 4294901760
          %v1480 = vsub.f32 %v1328, %v1479
          %v1481 = vand.u32 %v1480, 4294901760
          %v1482 = vsub.f32 %v1480, %v1481
          %v1483 = vand.u32 %v1482, 4294901760
          %1484 = vmatpush.xpose.msra.mxu0 %v1483
          %v1485 = vand.u32 %v1325, 4294901760
          %v1486 = vsub.f32 %v1325, %v1485
          %v1487 = vand.u32 %v1486, 4294901760
          %v1488 = vsub.f32 %v1486, %v1487
          %v1489 = vand.u32 %v1488, 4294901760
          %1490 = vmatpush.xpose.msra.mxu0 %v1489
          %v1491 = vand.u32 %v1322, 4294901760
          %v1492 = vsub.f32 %v1322, %v1491
          %v1493 = vand.u32 %v1492, 4294901760
          %v1494 = vsub.f32 %v1492, %v1493
          %v1495 = vand.u32 %v1494, 4294901760
          %1496 = vmatpush.xpose.msra.mxu0 %v1495
          %v1497 = vand.u32 %v1319, 4294901760
          %v1498 = vsub.f32 %v1319, %v1497
          %v1499 = vand.u32 %v1498, 4294901760
          %v1500 = vsub.f32 %v1498, %v1499
          %v1501 = vand.u32 %v1500, 4294901760
          %1502 = vmatpush.xpose.msra.mxu0 %v1501
          %v1503 = vand.u32 %v1316, 4294901760
          %1504 = vmatmul.f32.gmra.mxu0 %v1503
          %v1505 = vpop.f32.mrf.mxu0
          %v1506 = vadd.f32 %v1405, %v1505
          %1507 = vdwg.mxu0
          %v1508 = vand.u32 %v1364, 4294901760
          %v1509 = vsub.f32 %v1364, %v1508
          %1510 = vmatpush.xpose.msra.mxu0 %v1509
          %v1511 = vand.u32 %v1361, 4294901760
          %v1512 = vsub.f32 %v1361, %v1511
          %1513 = vmatpush.xpose.msra.mxu0 %v1512
          %v1514 = vand.u32 %v1358, 4294901760
          %v1515 = vsub.f32 %v1358, %v1514
          %1516 = vmatpush.xpose.msra.mxu0 %v1515
          %v1517 = vand.u32 %v1355, 4294901760
          %v1518 = vsub.f32 %v1355, %v1517
          %1519 = vmatpush.xpose.msra.mxu0 %v1518
          %v1520 = vand.u32 %v1352, 4294901760
          %v1521 = vsub.f32 %v1352, %v1520
          %1522 = vmatpush.xpose.msra.mxu0 %v1521
          %v1523 = vand.u32 %v1349, 4294901760
          %v1524 = vsub.f32 %v1349, %v1523
          %1525 = vmatpush.xpose.msra.mxu0 %v1524
          %v1526 = vand.u32 %v1346, 4294901760
          %v1527 = vsub.f32 %v1346, %v1526
          %1528 = vmatpush.xpose.msra.mxu0 %v1527
          %v1529 = vand.u32 %v1343, 4294901760
          %v1530 = vsub.f32 %v1343, %v1529
          %1531 = vmatpush.xpose.msra.mxu0 %v1530
          %v1532 = vand.u32 %v1340, 4294901760
          %v1533 = vsub.f32 %v1340, %v1532
          %1534 = vmatpush.xpose.msra.mxu0 %v1533
          %v1535 = vand.u32 %v1337, 4294901760
          %v1536 = vsub.f32 %v1337, %v1535
          %1537 = vmatpush.xpose.msra.mxu0 %v1536
          %v1538 = vand.u32 %v1334, 4294901760
          %v1539 = vsub.f32 %v1334, %v1538
          %1540 = vmatpush.xpose.msra.mxu0 %v1539
          %v1541 = vand.u32 %v1331, 4294901760
          %v1542 = vsub.f32 %v1331, %v1541
          %1543 = vmatpush.xpose.msra.mxu0 %v1542
          %v1544 = vand.u32 %v1328, 4294901760
          %v1545 = vsub.f32 %v1328, %v1544
          %1546 = vmatpush.xpose.msra.mxu0 %v1545
          %v1547 = vand.u32 %v1325, 4294901760
          %v1548 = vsub.f32 %v1325, %v1547
          %1549 = vmatpush.xpose.msra.mxu0 %v1548
          %v1550 = vand.u32 %v1322, 4294901760
          %v1551 = vsub.f32 %v1322, %v1550
          %1552 = vmatpush.xpose.msra.mxu0 %v1551
          %v1553 = vand.u32 %v1319, 4294901760
          %v1554 = vsub.f32 %v1319, %v1553
          %1555 = vmatpush.xpose.msra.mxu0 %v1554
          %v1556 = vand.u32 %v1316, 4294901760
          %v1557 = vsub.f32 %v1316, %v1556
          %1558 = vmatmul.f32.gmra.mxu0 %v1557
          %v1559 = vpop.f32.mrf.mxu0
          %v1560 = vadd.f32 %v1506, %v1559
          %1561 = vdwg.mxu0
          %v1562 = vand.u32 %v1364, 4294901760
          %1563 = vmatpush.xpose.msra.mxu0 %v1562
          %v1564 = vand.u32 %v1361, 4294901760
          %1565 = vmatpush.xpose.msra.mxu0 %v1564
          %v1566 = vand.u32 %v1358, 4294901760
          %1567 = vmatpush.xpose.msra.mxu0 %v1566
          %v1568 = vand.u32 %v1355, 4294901760
          %1569 = vmatpush.xpose.msra.mxu0 %v1568
          %v1570 = vand.u32 %v1352, 4294901760
          %1571 = vmatpush.xpose.msra.mxu0 %v1570
          %v1572 = vand.u32 %v1349, 4294901760
          %1573 = vmatpush.xpose.msra.mxu0 %v1572
          %v1574 = vand.u32 %v1346, 4294901760
          %1575 = vmatpush.xpose.msra.mxu0 %v1574
          %v1576 = vand.u32 %v1343, 4294901760
          %1577 = vmatpush.xpose.msra.mxu0 %v1576
          %v1578 = vand.u32 %v1340, 4294901760
          %1579 = vmatpush.xpose.msra.mxu0 %v1578
          %v1580 = vand.u32 %v1337, 4294901760
          %1581 = vmatpush.xpose.msra.mxu0 %v1580
          %v1582 = vand.u32 %v1334, 4294901760
          %1583 = vmatpush.xpose.msra.mxu0 %v1582
          %v1584 = vand.u32 %v1331, 4294901760
          %1585 = vmatpush.xpose.msra.mxu0 %v1584
          %v1586 = vand.u32 %v1328, 4294901760
          %1587 = vmatpush.xpose.msra.mxu0 %v1586
          %v1588 = vand.u32 %v1325, 4294901760
          %1589 = vmatpush.xpose.msra.mxu0 %v1588
          %v1590 = vand.u32 %v1322, 4294901760
          %1591 = vmatpush.xpose.msra.mxu0 %v1590
          %v1592 = vand.u32 %v1319, 4294901760
          %1593 = vmatpush.xpose.msra.mxu0 %v1592
          %v1594 = vand.u32 %v1316, 4294901760
          %v1595 = vsub.f32 %v1316, %v1594
          %v1596 = vand.u32 %v1595, 4294901760
          %1597 = vmatmul.f32.gmra.mxu0 %v1596
          %v1598 = vpop.f32.mrf.mxu0
          %v1599 = vadd.f32 %v1560, %v1598
          %1600 = vdwg.mxu0
          %v1601 = vand.u32 %v1364, 4294901760
          %v1602 = vsub.f32 %v1364, %v1601
          %v1603 = vand.u32 %v1602, 4294901760
          %1604 = vmatpush.xpose.msra.mxu0 %v1603
          %v1605 = vand.u32 %v1361, 4294901760
          %v1606 = vsub.f32 %v1361, %v1605
          %v1607 = vand.u32 %v1606, 4294901760
          %1608 = vmatpush.xpose.msra.mxu0 %v1607
          %v1609 = vand.u32 %v1358, 4294901760
          %v1610 = vsub.f32 %v1358, %v1609
          %v1611 = vand.u32 %v1610, 4294901760
          %1612 = vmatpush.xpose.msra.mxu0 %v1611
          %v1613 = vand.u32 %v1355, 4294901760
          %v1614 = vsub.f32 %v1355, %v1613
          %v1615 = vand.u32 %v1614, 4294901760
          %1616 = vmatpush.xpose.msra.mxu0 %v1615
          %v1617 = vand.u32 %v1352, 4294901760
          %v1618 = vsub.f32 %v1352, %v1617
          %v1619 = vand.u32 %v1618, 4294901760
          %1620 = vmatpush.xpose.msra.mxu0 %v1619
          %v1621 = vand.u32 %v1349, 4294901760
          %v1622 = vsub.f32 %v1349, %v1621
          %v1623 = vand.u32 %v1622, 4294901760
          %1624 = vmatpush.xpose.msra.mxu0 %v1623
          %v1625 = vand.u32 %v1346, 4294901760
          %v1626 = vsub.f32 %v1346, %v1625
          %v1627 = vand.u32 %v1626, 4294901760
          %1628 = vmatpush.xpose.msra.mxu0 %v1627
          %v1629 = vand.u32 %v1343, 4294901760
          %v1630 = vsub.f32 %v1343, %v1629
          %v1631 = vand.u32 %v1630, 4294901760
          %1632 = vmatpush.xpose.msra.mxu0 %v1631
          %v1633 = vand.u32 %v1340, 4294901760
          %v1634 = vsub.f32 %v1340, %v1633
          %v1635 = vand.u32 %v1634, 4294901760
          %1636 = vmatpush.xpose.msra.mxu0 %v1635
          %v1637 = vand.u32 %v1337, 4294901760
          %v1638 = vsub.f32 %v1337, %v1637
          %v1639 = vand.u32 %v1638, 4294901760
          %1640 = vmatpush.xpose.msra.mxu0 %v1639
          %v1641 = vand.u32 %v1334, 4294901760
          %v1642 = vsub.f32 %v1334, %v1641
          %v1643 = vand.u32 %v1642, 4294901760
          %1644 = vmatpush.xpose.msra.mxu0 %v1643
          %v1645 = vand.u32 %v1331, 4294901760
          %v1646 = vsub.f32 %v1331, %v1645
          %v1647 = vand.u32 %v1646, 4294901760
          %1648 = vmatpush.xpose.msra.mxu0 %v1647
          %v1649 = vand.u32 %v1328, 4294901760
          %v1650 = vsub.f32 %v1328, %v1649
          %v1651 = vand.u32 %v1650, 4294901760
          %1652 = vmatpush.xpose.msra.mxu0 %v1651
          %v1653 = vand.u32 %v1325, 4294901760
          %v1654 = vsub.f32 %v1325, %v1653
          %v1655 = vand.u32 %v1654, 4294901760
          %1656 = vmatpush.xpose.msra.mxu0 %v1655
          %v1657 = vand.u32 %v1322, 4294901760
          %v1658 = vsub.f32 %v1322, %v1657
          %v1659 = vand.u32 %v1658, 4294901760
          %1660 = vmatpush.xpose.msra.mxu0 %v1659
          %v1661 = vand.u32 %v1319, 4294901760
          %v1662 = vsub.f32 %v1319, %v1661
          %v1663 = vand.u32 %v1662, 4294901760
          %1664 = vmatpush.xpose.msra.mxu0 %v1663
          %v1665 = vand.u32 %v1316, 4294901760
          %1666 = vmatmul.f32.gmra.mxu0 %v1665
          %v1667 = vpop.f32.mrf.mxu0
          %v1668 = vadd.f32 %v1599, %v1667
          %1669 = vdwg.mxu0
          %v1670 = vand.u32 %v1364, 4294901760
          %1671 = vmatpush.xpose.msra.mxu0 %v1670
          %v1672 = vand.u32 %v1361, 4294901760
          %1673 = vmatpush.xpose.msra.mxu0 %v1672
          %v1674 = vand.u32 %v1358, 4294901760
          %1675 = vmatpush.xpose.msra.mxu0 %v1674
          %v1676 = vand.u32 %v1355, 4294901760
          %1677 = vmatpush.xpose.msra.mxu0 %v1676
          %v1678 = vand.u32 %v1352, 4294901760
          %1679 = vmatpush.xpose.msra.mxu0 %v1678
          %v1680 = vand.u32 %v1349, 4294901760
          %1681 = vmatpush.xpose.msra.mxu0 %v1680
          %v1682 = vand.u32 %v1346, 4294901760
          %1683 = vmatpush.xpose.msra.mxu0 %v1682
          %v1684 = vand.u32 %v1343, 4294901760
          %1685 = vmatpush.xpose.msra.mxu0 %v1684
          %v1686 = vand.u32 %v1340, 4294901760
          %1687 = vmatpush.xpose.msra.mxu0 %v1686
          %v1688 = vand.u32 %v1337, 4294901760
          %1689 = vmatpush.xpose.msra.mxu0 %v1688
          %v1690 = vand.u32 %v1334, 4294901760
          %1691 = vmatpush.xpose.msra.mxu0 %v1690
          %v1692 = vand.u32 %v1331, 4294901760
          %1693 = vmatpush.xpose.msra.mxu0 %v1692
          %v1694 = vand.u32 %v1328, 4294901760
          %1695 = vmatpush.xpose.msra.mxu0 %v1694
          %v1696 = vand.u32 %v1325, 4294901760
          %1697 = vmatpush.xpose.msra.mxu0 %v1696
          %v1698 = vand.u32 %v1322, 4294901760
          %1699 = vmatpush.xpose.msra.mxu0 %v1698
          %v1700 = vand.u32 %v1319, 4294901760
          %1701 = vmatpush.xpose.msra.mxu0 %v1700
          %v1702 = vand.u32 %v1316, 4294901760
          %1703 = vmatmul.f32.gmra.mxu0 %v1702
          %v1704 = vpop.f32.mrf.mxu0
          %v1705 = vadd.f32 %v1668, %v1704
          %1706 = vdwg.mxu0
          %1707 = vst [vmem:[#allocation3] sm:$0x1] %v1705
        $region52: #{tpu_custom_call.1} parent=35 // pred_fallthru
          _
        %v1708 = vld [vmem:[%s344] sm:$0xff]
        %v1710 = vperm.slane %v403, 0
        %vm1712 = vcmask 130048
        %v1714 = vsel %vm1712, %v1708, 0
        %1716 = vmatpush.msra.mxu0 0.0
        %1717 = vmatpush.msra.mxu0 0.0
        %1718 = vmatpush.msra.mxu0 0.0
        %1719 = vmatpush.msra.mxu0 0.0
        %1720 = vmatpush.msra.mxu0 0.0
        %1721 = vmatpush.msra.mxu0 0.0
        %1722 = vmatpush.msra.mxu0 0.0
        %1723 = vmatpush.msra.mxu0 0.0
        %1724 = vmatpush.msra.mxu0 0.0
        %1725 = vmatpush.msra.mxu0 0.0
        %1726 = vmatpush.msra.mxu0 0.0
        %1727 = vmatpush.msra.mxu0 0.0
        %1728 = vmatpush.msra.mxu0 0.0
        %1729 = vmatpush.msra.mxu0 0.0
        %1730 = vmatpush.msra.mxu0 %v402
        %1731 = vmatpush.msra.mxu0 %v401
        %1732 = vmatmul.f32.gmra.mxu0 %v1714
        %v1733 = vpop.f32.mrf.mxu0
        %v1734 = vadd.f32 %v1710, %v1733
        %1735 = vdwg.mxu0
        %vm1736 = vcmask 261120
        %1737 = vst.msk [vmem:[%s400] sm:$0xff] %vm1736, %v1734
        %v1738 = vld [vmem:[#allocation2] sm:$0xff]
        %v1739 = vld [vmem:[#allocation2 + $0x8] sm:$0xff]
        %v1740 = vld [vmem:[#allocation2 + $0x10] sm:$0xff]
        %v1741 = vld [vmem:[#allocation2 + $0x18] sm:$0xff]
        %v1742 = vld [vmem:[#allocation2 + $0x20] sm:$0xff]
        %v1743 = vld [vmem:[#allocation2 + $0x28] sm:$0xff]
        %v1744 = vld [vmem:[#allocation2 + $0x30] sm:$0xff]
        %v1745 = vld [vmem:[#allocation2 + $0x38] sm:$0xff]
        %v1746 = vld [vmem:[#allocation2 + $0x40] sm:$0xff]
        %v1747 = vld [vmem:[#allocation2 + $0x48] sm:$0xff]
        %v1748 = vld [vmem:[#allocation2 + $0x50] sm:$0xff]
        %v1749 = vld [vmem:[#allocation2 + $0x58] sm:$0xff]
        %v1750 = vld [vmem:[#allocation2 + $0x60] sm:$0xff]
        %v1751 = vld [vmem:[#allocation2 + $0x68] sm:$0xff]
        %v1752 = vld [vmem:[#allocation2 + $0x70] sm:$0xff]
        %v1753 = vld [vmem:[#allocation2 + $0x78] sm:$0xff]
        %v1755 = vsel %vm1736, %v1734, 0
        %v1758 = vsel %vm1736, %v1738, 0
        %v1761 = vsel %vm1736, %v1739, 0
        %v1764 = vsel %vm1736, %v1740, 0
        %v1767 = vsel %vm1736, %v1741, 0
        %v1770 = vsel %vm1736, %v1742, 0
        %v1773 = vsel %vm1736, %v1743, 0
        %v1776 = vsel %vm1736, %v1744, 0
        %v1779 = vsel %vm1736, %v1745, 0
        %v1782 = vsel %vm1736, %v1746, 0
        %v1785 = vsel %vm1736, %v1747, 0
        %v1788 = vsel %vm1736, %v1748, 0
        %v1791 = vsel %vm1736, %v1749, 0
        %v1794 = vsel %vm1736, %v1750, 0
        %v1797 = vsel %vm1736, %v1751, 0
        %v1800 = vsel %vm1736, %v1752, 0
        %v1803 = vsel %vm1736, %v1753, 0
        %v1805 = vand.u32 %v1803, 4294901760
        %1806 = vmatpush.xpose.msra.mxu0 %v1805
        %v1807 = vand.u32 %v1800, 4294901760
        %1808 = vmatpush.xpose.msra.mxu0 %v1807
        %v1809 = vand.u32 %v1797, 4294901760
        %1810 = vmatpush.xpose.msra.mxu0 %v1809
        %v1811 = vand.u32 %v1794, 4294901760
        %1812 = vmatpush.xpose.msra.mxu0 %v1811
        %v1813 = vand.u32 %v1791, 4294901760
        %1814 = vmatpush.xpose.msra.mxu0 %v1813
        %v1815 = vand.u32 %v1788, 4294901760
        %1816 = vmatpush.xpose.msra.mxu0 %v1815
        %v1817 = vand.u32 %v1785, 4294901760
        %1818 = vmatpush.xpose.msra.mxu0 %v1817
        %v1819 = vand.u32 %v1782, 4294901760
        %1820 = vmatpush.xpose.msra.mxu0 %v1819
        %v1821 = vand.u32 %v1779, 4294901760
        %1822 = vmatpush.xpose.msra.mxu0 %v1821
        %v1823 = vand.u32 %v1776, 4294901760
        %1824 = vmatpush.xpose.msra.mxu0 %v1823
        %v1825 = vand.u32 %v1773, 4294901760
        %1826 = vmatpush.xpose.msra.mxu0 %v1825
        %v1827 = vand.u32 %v1770, 4294901760
        %1828 = vmatpush.xpose.msra.mxu0 %v1827
        %v1829 = vand.u32 %v1767, 4294901760
        %1830 = vmatpush.xpose.msra.mxu0 %v1829
        %v1831 = vand.u32 %v1764, 4294901760
        %1832 = vmatpush.xpose.msra.mxu0 %v1831
        %v1833 = vand.u32 %v1761, 4294901760
        %1834 = vmatpush.xpose.msra.mxu0 %v1833
        %v1835 = vand.u32 %v1758, 4294901760
        %1836 = vmatpush.xpose.msra.mxu0 %v1835
        %v1837 = vand.u32 %v1755, 4294901760
        %v1838 = vsub.f32 %v1755, %v1837
        %v1839 = vand.u32 %v1838, 4294901760
        %v1840 = vsub.f32 %v1838, %v1839
        %v1841 = vand.u32 %v1840, 4294901760
        %1842 = vmatmul.f32.gmra.mxu0 %v1841
        %v1843 = vpop.f32.mrf.mxu0
        %v1844 = vadd.f32 0.0, %v1843
        %1845 = vdwg.mxu0
        %v1846 = vand.u32 %v1803, 4294901760
        %v1847 = vsub.f32 %v1803, %v1846
        %v1848 = vand.u32 %v1847, 4294901760
        %v1849 = vsub.f32 %v1847, %v1848
        %v1850 = vand.u32 %v1849, 4294901760
        %1851 = vmatpush.xpose.msra.mxu0 %v1850
        %v1852 = vand.u32 %v1800, 4294901760
        %v1853 = vsub.f32 %v1800, %v1852
        %v1854 = vand.u32 %v1853, 4294901760
        %v1855 = vsub.f32 %v1853, %v1854
        %v1856 = vand.u32 %v1855, 4294901760
        %1857 = vmatpush.xpose.msra.mxu0 %v1856
        %v1858 = vand.u32 %v1797, 4294901760
        %v1859 = vsub.f32 %v1797, %v1858
        %v1860 = vand.u32 %v1859, 4294901760
        %v1861 = vsub.f32 %v1859, %v1860
        %v1862 = vand.u32 %v1861, 4294901760
        %1863 = vmatpush.xpose.msra.mxu0 %v1862
        %v1864 = vand.u32 %v1794, 4294901760
        %v1865 = vsub.f32 %v1794, %v1864
        %v1866 = vand.u32 %v1865, 4294901760
        %v1867 = vsub.f32 %v1865, %v1866
        %v1868 = vand.u32 %v1867, 4294901760
        %1869 = vmatpush.xpose.msra.mxu0 %v1868
        %v1870 = vand.u32 %v1791, 4294901760
        %v1871 = vsub.f32 %v1791, %v1870
        %v1872 = vand.u32 %v1871, 4294901760
        %v1873 = vsub.f32 %v1871, %v1872
        %v1874 = vand.u32 %v1873, 4294901760
        %1875 = vmatpush.xpose.msra.mxu0 %v1874
        %v1876 = vand.u32 %v1788, 4294901760
        %v1877 = vsub.f32 %v1788, %v1876
        %v1878 = vand.u32 %v1877, 4294901760
        %v1879 = vsub.f32 %v1877, %v1878
        %v1880 = vand.u32 %v1879, 4294901760
        %1881 = vmatpush.xpose.msra.mxu0 %v1880
        %v1882 = vand.u32 %v1785, 4294901760
        %v1883 = vsub.f32 %v1785, %v1882
        %v1884 = vand.u32 %v1883, 4294901760
        %v1885 = vsub.f32 %v1883, %v1884
        %v1886 = vand.u32 %v1885, 4294901760
        %1887 = vmatpush.xpose.msra.mxu0 %v1886
        %v1888 = vand.u32 %v1782, 4294901760
        %v1889 = vsub.f32 %v1782, %v1888
        %v1890 = vand.u32 %v1889, 4294901760
        %v1891 = vsub.f32 %v1889, %v1890
        %v1892 = vand.u32 %v1891, 4294901760
        %1893 = vmatpush.xpose.msra.mxu0 %v1892
        %v1894 = vand.u32 %v1779, 4294901760
        %v1895 = vsub.f32 %v1779, %v1894
        %v1896 = vand.u32 %v1895, 4294901760
        %v1897 = vsub.f32 %v1895, %v1896
        %v1898 = vand.u32 %v1897, 4294901760
        %1899 = vmatpush.xpose.msra.mxu0 %v1898
        %v1900 = vand.u32 %v1776, 4294901760
        %v1901 = vsub.f32 %v1776, %v1900
        %v1902 = vand.u32 %v1901, 4294901760
        %v1903 = vsub.f32 %v1901, %v1902
        %v1904 = vand.u32 %v1903, 4294901760
        %1905 = vmatpush.xpose.msra.mxu0 %v1904
        %v1906 = vand.u32 %v1773, 4294901760
        %v1907 = vsub.f32 %v1773, %v1906
        %v1908 = vand.u32 %v1907, 4294901760
        %v1909 = vsub.f32 %v1907, %v1908
        %v1910 = vand.u32 %v1909, 4294901760
        %1911 = vmatpush.xpose.msra.mxu0 %v1910
        %v1912 = vand.u32 %v1770, 4294901760
        %v1913 = vsub.f32 %v1770, %v1912
        %v1914 = vand.u32 %v1913, 4294901760
        %v1915 = vsub.f32 %v1913, %v1914
        %v1916 = vand.u32 %v1915, 4294901760
        %1917 = vmatpush.xpose.msra.mxu0 %v1916
        %v1918 = vand.u32 %v1767, 4294901760
        %v1919 = vsub.f32 %v1767, %v1918
        %v1920 = vand.u32 %v1919, 4294901760
        %v1921 = vsub.f32 %v1919, %v1920
        %v1922 = vand.u32 %v1921, 4294901760
        %1923 = vmatpush.xpose.msra.mxu0 %v1922
        %v1924 = vand.u32 %v1764, 4294901760
        %v1925 = vsub.f32 %v1764, %v1924
        %v1926 = vand.u32 %v1925, 4294901760
        %v1927 = vsub.f32 %v1925, %v1926
        %v1928 = vand.u32 %v1927, 4294901760
        %1929 = vmatpush.xpose.msra.mxu0 %v1928
        %v1930 = vand.u32 %v1761, 4294901760
        %v1931 = vsub.f32 %v1761, %v1930
        %v1932 = vand.u32 %v1931, 4294901760
        %v1933 = vsub.f32 %v1931, %v1932
        %v1934 = vand.u32 %v1933, 4294901760
        %1935 = vmatpush.xpose.msra.mxu0 %v1934
        %v1936 = vand.u32 %v1758, 4294901760
        %v1937 = vsub.f32 %v1758, %v1936
        %v1938 = vand.u32 %v1937, 4294901760
        %v1939 = vsub.f32 %v1937, %v1938
        %v1940 = vand.u32 %v1939, 4294901760
        %1941 = vmatpush.xpose.msra.mxu0 %v1940
        %v1942 = vand.u32 %v1755, 4294901760
        %1943 = vmatmul.f32.gmra.mxu0 %v1942
        %v1944 = vpop.f32.mrf.mxu0
        %v1945 = vadd.f32 %v1844, %v1944
        %1946 = vdwg.mxu0
        %v1947 = vand.u32 %v1803, 4294901760
        %v1948 = vsub.f32 %v1803, %v1947
        %1949 = vmatpush.xpose.msra.mxu0 %v1948
        %v1950 = vand.u32 %v1800, 4294901760
        %v1951 = vsub.f32 %v1800, %v1950
        %1952 = vmatpush.xpose.msra.mxu0 %v1951
        %v1953 = vand.u32 %v1797, 4294901760
        %v1954 = vsub.f32 %v1797, %v1953
        %1955 = vmatpush.xpose.msra.mxu0 %v1954
        %v1956 = vand.u32 %v1794, 4294901760
        %v1957 = vsub.f32 %v1794, %v1956
        %1958 = vmatpush.xpose.msra.mxu0 %v1957
        %v1959 = vand.u32 %v1791, 4294901760
        %v1960 = vsub.f32 %v1791, %v1959
        %1961 = vmatpush.xpose.msra.mxu0 %v1960
        %v1962 = vand.u32 %v1788, 4294901760
        %v1963 = vsub.f32 %v1788, %v1962
        %1964 = vmatpush.xpose.msra.mxu0 %v1963
        %v1965 = vand.u32 %v1785, 4294901760
        %v1966 = vsub.f32 %v1785, %v1965
        %1967 = vmatpush.xpose.msra.mxu0 %v1966
        %v1968 = vand.u32 %v1782, 4294901760
        %v1969 = vsub.f32 %v1782, %v1968
        %1970 = vmatpush.xpose.msra.mxu0 %v1969
        %v1971 = vand.u32 %v1779, 4294901760
        %v1972 = vsub.f32 %v1779, %v1971
        %1973 = vmatpush.xpose.msra.mxu0 %v1972
        %v1974 = vand.u32 %v1776, 4294901760
        %v1975 = vsub.f32 %v1776, %v1974
        %1976 = vmatpush.xpose.msra.mxu0 %v1975
        %v1977 = vand.u32 %v1773, 4294901760
        %v1978 = vsub.f32 %v1773, %v1977
        %1979 = vmatpush.xpose.msra.mxu0 %v1978
        %v1980 = vand.u32 %v1770, 4294901760
        %v1981 = vsub.f32 %v1770, %v1980
        %1982 = vmatpush.xpose.msra.mxu0 %v1981
        %v1983 = vand.u32 %v1767, 4294901760
        %v1984 = vsub.f32 %v1767, %v1983
        %1985 = vmatpush.xpose.msra.mxu0 %v1984
        %v1986 = vand.u32 %v1764, 4294901760
        %v1987 = vsub.f32 %v1764, %v1986
        %1988 = vmatpush.xpose.msra.mxu0 %v1987
        %v1989 = vand.u32 %v1761, 4294901760
        %v1990 = vsub.f32 %v1761, %v1989
        %1991 = vmatpush.xpose.msra.mxu0 %v1990
        %v1992 = vand.u32 %v1758, 4294901760
        %v1993 = vsub.f32 %v1758, %v1992
        %1994 = vmatpush.xpose.msra.mxu0 %v1993
        %v1995 = vand.u32 %v1755, 4294901760
        %v1996 = vsub.f32 %v1755, %v1995
        %1997 = vmatmul.f32.gmra.mxu0 %v1996
        %v1998 = vpop.f32.mrf.mxu0
        %v1999 = vadd.f32 %v1945, %v1998
        %2000 = vdwg.mxu0
        %v2001 = vand.u32 %v1803, 4294901760
        %2002 = vmatpush.xpose.msra.mxu0 %v2001
        %v2003 = vand.u32 %v1800, 4294901760
        %2004 = vmatpush.xpose.msra.mxu0 %v2003
        %v2005 = vand.u32 %v1797, 4294901760
        %2006 = vmatpush.xpose.msra.mxu0 %v2005
        %v2007 = vand.u32 %v1794, 4294901760
        %2008 = vmatpush.xpose.msra.mxu0 %v2007
        %v2009 = vand.u32 %v1791, 4294901760
        %2010 = vmatpush.xpose.msra.mxu0 %v2009
        %v2011 = vand.u32 %v1788, 4294901760
        %2012 = vmatpush.xpose.msra.mxu0 %v2011
        %v2013 = vand.u32 %v1785, 4294901760
        %2014 = vmatpush.xpose.msra.mxu0 %v2013
        %v2015 = vand.u32 %v1782, 4294901760
        %2016 = vmatpush.xpose.msra.mxu0 %v2015
        %v2017 = vand.u32 %v1779, 4294901760
        %2018 = vmatpush.xpose.msra.mxu0 %v2017
        %v2019 = vand.u32 %v1776, 4294901760
        %2020 = vmatpush.xpose.msra.mxu0 %v2019
        %v2021 = vand.u32 %v1773, 4294901760
        %2022 = vmatpush.xpose.msra.mxu0 %v2021
        %v2023 = vand.u32 %v1770, 4294901760
        %2024 = vmatpush.xpose.msra.mxu0 %v2023
        %v2025 = vand.u32 %v1767, 4294901760
        %2026 = vmatpush.xpose.msra.mxu0 %v2025
        %v2027 = vand.u32 %v1764, 4294901760
        %2028 = vmatpush.xpose.msra.mxu0 %v2027
        %v2029 = vand.u32 %v1761, 4294901760
        %2030 = vmatpush.xpose.msra.mxu0 %v2029
        %v2031 = vand.u32 %v1758, 4294901760
        %2032 = vmatpush.xpose.msra.mxu0 %v2031
        %v2033 = vand.u32 %v1755, 4294901760
        %v2034 = vsub.f32 %v1755, %v2033
        %v2035 = vand.u32 %v2034, 4294901760
        %2036 = vmatmul.f32.gmra.mxu0 %v2035
        %v2037 = vpop.f32.mrf.mxu0
        %v2038 = vadd.f32 %v1999, %v2037
        %2039 = vdwg.mxu0
        %v2040 = vand.u32 %v1803, 4294901760
        %v2041 = vsub.f32 %v1803, %v2040
        %v2042 = vand.u32 %v2041, 4294901760
        %2043 = vmatpush.xpose.msra.mxu0 %v2042
        %v2044 = vand.u32 %v1800, 4294901760
        %v2045 = vsub.f32 %v1800, %v2044
        %v2046 = vand.u32 %v2045, 4294901760
        %2047 = vmatpush.xpose.msra.mxu0 %v2046
        %v2048 = vand.u32 %v1797, 4294901760
        %v2049 = vsub.f32 %v1797, %v2048
        %v2050 = vand.u32 %v2049, 4294901760
        %2051 = vmatpush.xpose.msra.mxu0 %v2050
        %v2052 = vand.u32 %v1794, 4294901760
        %v2053 = vsub.f32 %v1794, %v2052
        %v2054 = vand.u32 %v2053, 4294901760
        %2055 = vmatpush.xpose.msra.mxu0 %v2054
        %v2056 = vand.u32 %v1791, 4294901760
        %v2057 = vsub.f32 %v1791, %v2056
        %v2058 = vand.u32 %v2057, 4294901760
        %2059 = vmatpush.xpose.msra.mxu0 %v2058
        %v2060 = vand.u32 %v1788, 4294901760
        %v2061 = vsub.f32 %v1788, %v2060
        %v2062 = vand.u32 %v2061, 4294901760
        %2063 = vmatpush.xpose.msra.mxu0 %v2062
        %v2064 = vand.u32 %v1785, 4294901760
        %v2065 = vsub.f32 %v1785, %v2064
        %v2066 = vand.u32 %v2065, 4294901760
        %2067 = vmatpush.xpose.msra.mxu0 %v2066
        %v2068 = vand.u32 %v1782, 4294901760
        %v2069 = vsub.f32 %v1782, %v2068
        %v2070 = vand.u32 %v2069, 4294901760
        %2071 = vmatpush.xpose.msra.mxu0 %v2070
        %v2072 = vand.u32 %v1779, 4294901760
        %v2073 = vsub.f32 %v1779, %v2072
        %v2074 = vand.u32 %v2073, 4294901760
        %2075 = vmatpush.xpose.msra.mxu0 %v2074
        %v2076 = vand.u32 %v1776, 4294901760
        %v2077 = vsub.f32 %v1776, %v2076
        %v2078 = vand.u32 %v2077, 4294901760
        %2079 = vmatpush.xpose.msra.mxu0 %v2078
        %v2080 = vand.u32 %v1773, 4294901760
        %v2081 = vsub.f32 %v1773, %v2080
        %v2082 = vand.u32 %v2081, 4294901760
        %2083 = vmatpush.xpose.msra.mxu0 %v2082
        %v2084 = vand.u32 %v1770, 4294901760
        %v2085 = vsub.f32 %v1770, %v2084
        %v2086 = vand.u32 %v2085, 4294901760
        %2087 = vmatpush.xpose.msra.mxu0 %v2086
        %v2088 = vand.u32 %v1767, 4294901760
        %v2089 = vsub.f32 %v1767, %v2088
        %v2090 = vand.u32 %v2089, 4294901760
        %2091 = vmatpush.xpose.msra.mxu0 %v2090
        %v2092 = vand.u32 %v1764, 4294901760
        %v2093 = vsub.f32 %v1764, %v2092
        %v2094 = vand.u32 %v2093, 4294901760
        %2095 = vmatpush.xpose.msra.mxu0 %v2094
        %v2096 = vand.u32 %v1761, 4294901760
        %v2097 = vsub.f32 %v1761, %v2096
        %v2098 = vand.u32 %v2097, 4294901760
        %2099 = vmatpush.xpose.msra.mxu0 %v2098
        %v2100 = vand.u32 %v1758, 4294901760
        %v2101 = vsub.f32 %v1758, %v2100
        %v2102 = vand.u32 %v2101, 4294901760
        %2103 = vmatpush.xpose.msra.mxu0 %v2102
        %v2104 = vand.u32 %v1755, 4294901760
        %2105 = vmatmul.f32.gmra.mxu0 %v2104
        %v2106 = vpop.f32.mrf.mxu0
        %v2107 = vadd.f32 %v2038, %v2106
        %2108 = vdwg.mxu0
        %v2109 = vand.u32 %v1803, 4294901760
        %2110 = vmatpush.xpose.msra.mxu0 %v2109
        %v2111 = vand.u32 %v1800, 4294901760
        %2112 = vmatpush.xpose.msra.mxu0 %v2111
        %v2113 = vand.u32 %v1797, 4294901760
        %2114 = vmatpush.xpose.msra.mxu0 %v2113
        %v2115 = vand.u32 %v1794, 4294901760
        %2116 = vmatpush.xpose.msra.mxu0 %v2115
        %v2117 = vand.u32 %v1791, 4294901760
        %2118 = vmatpush.xpose.msra.mxu0 %v2117
        %v2119 = vand.u32 %v1788, 4294901760
        %2120 = vmatpush.xpose.msra.mxu0 %v2119
        %v2121 = vand.u32 %v1785, 4294901760
        %2122 = vmatpush.xpose.msra.mxu0 %v2121
        %v2123 = vand.u32 %v1782, 4294901760
        %2124 = vmatpush.xpose.msra.mxu0 %v2123
        %v2125 = vand.u32 %v1779, 4294901760
        %2126 = vmatpush.xpose.msra.mxu0 %v2125
        %v2127 = vand.u32 %v1776, 4294901760
        %2128 = vmatpush.xpose.msra.mxu0 %v2127
        %v2129 = vand.u32 %v1773, 4294901760
        %2130 = vmatpush.xpose.msra.mxu0 %v2129
        %v2131 = vand.u32 %v1770, 4294901760
        %2132 = vmatpush.xpose.msra.mxu0 %v2131
        %v2133 = vand.u32 %v1767, 4294901760
        %2134 = vmatpush.xpose.msra.mxu0 %v2133
        %v2135 = vand.u32 %v1764, 4294901760
        %2136 = vmatpush.xpose.msra.mxu0 %v2135
        %v2137 = vand.u32 %v1761, 4294901760
        %2138 = vmatpush.xpose.msra.mxu0 %v2137
        %v2139 = vand.u32 %v1758, 4294901760
        %2140 = vmatpush.xpose.msra.mxu0 %v2139
        %v2141 = vand.u32 %v1755, 4294901760
        %2142 = vmatmul.f32.gmra.mxu0 %v2141
        %v2143 = vpop.f32.mrf.mxu0
        %v2144 = vadd.f32 %v2107, %v2143
        %2145 = vdwg.mxu0
        %v2146 = vmul.f32 %v1734, %v1734
        %v2147 = vsel %vm1736, %v2146, 0.0
        %2148 = vadd.xlane.f32.xlu0 %v2147
        %v2149 = vpop.xlane.xlu0 %2148
        %v2150 = vmul.f32 %v2144, 2.0
        %v2151 = vsub.f32 %v2150, %v2149
        %v2152 = vld [vmem:[#allocation3] sm:$0x1]
        %v2154 = vperm.slane %v2152, 0
        %v2156 = vsub.f32 %v2151, %v2154
        %v2157 = vlaneseq
        %v2158 = vand.u32 %v2157, 127
        %vm2159 = vcmp.lt.s32.totalorder %v2158, 4
        %v2160 = vsel %vm2159, %v2156, -inf
        %2161 = vmax.xlane.f32.xlu0 %v2160
        %v2162 = vpop.xlane.xlu0 %2161
        %v2163 = vsel %vm2159, %v2156, inf
        %2164 = vmin.xlane.f32.xlu0 %v2163
        %v2165 = vpop.xlane.xlu0 %2164
        %v2166 = vsub.f32 %v2165, 1.0
        %vm2167 = vcmp.eq.f32.partialorder %v2156, %v2162
        %vm2168 = vmand %vm2159, %vm2167
        %v2169 = vsel %vm2168, %v2158, 4
        %v2170 = vand.u32 %v2169, 65535
        %v2171 = vshra.s32 %v2169, 16
        %v2172 = vcvt.s32.f32 %v2170
        %v2173 = vcvt.s32.f32 %v2171
        %2174 = vmin.xlane.f32.xlu0 %v2173
        %v2175 = vpop.xlane.xlu0 %2174
        %vm2176 = vcmp.eq.f32.partialorder %v2173, %v2175
        %v2177 = vsel %vm2176, %v2172, inf
        %2178 = vmin.xlane.f32.xlu0 %v2177
        %v2179 = vpop.xlane.xlu0 %2178
        %v2180 = vcvt.f32.s32 %v2179
        %v2181 = vcvt.f32.s32 %v2175
        %v2182 = vshll.u32 %v2181, 16
        %v2183 = vadd.s32 %v2182, %v2180
        %v2184 = vcvt.s32.f32 %v2183
        %v2185 = vsel %vm2159, %v2156, %v2166
        %vm2186 = vcmp.eq.s32.totalorder %v2158, 5
        %v2187 = vsel %vm2186, %v2184, %v2185
        %2188 = vst [vmem:[%s379] sm:$0xff] %v2187
        %s2189 = sand.u32 %s152, 1
        %s2190 = scalar_lea.sflag [#allocation6], %s2189
        %s2191 = sand.u32 %s152, 1
        %s2192 = smul.addr %s2191, 8
        %s2193 = scalar_lea.vmem [#allocation10], %s2192
        %s2194 = sand.u32 %s34, 1
        %s2195 = scalar_lea.sflag [#allocation12], %s2194
        %s2196 = sand.u32 %s178, 1
        %s2197 = smul.addr %s2196, 16
        %s2198 = scalar_lea.vmem [#allocation11], %s2197
        %s2199 = sand.u32 %s34, 1
        %s2200 = scalar_lea.sflag [#allocation12], %s2199
        %s2201 = sand.u32 %s204, 1
        %s2202 = smul.addr %s2201, 4
        %s2203 = scalar_lea.vmem [#allocation13], %s2202
        %s2204 = sand.u32 %s232, 1
        %s2205 = scalar_lea.sflag [#allocation15], %s2204
        %s2206 = sand.u32 %s232, 1
        %s2207 = smul.addr %s2206, 8
        %s2208 = scalar_lea.vmem [#allocation14], %s2207
        // Predicated region
        $region53: #{tpu_custom_call.1} parent=35 // pred_check
          %p2209 = pneg %p162
        $region54: #{tpu_custom_call.1} parent=35 // pred_check_branch
          %2211 = sbr.rel (%p2209) target = $region56
        $region55: #{tpu_custom_call.1} parent=35 // pred_region
          %2213 = vsyncadd %s2190, 0
          %s2214 = sadd.s32 %s39, %s38
          %s2215 = smul.addr %s2214, 8
          %s2216 = scalar_lea.hbm %s4, %s2215
          %s2218 = sshll.u32 %s2193, 4
          %s2219 = int_to_ptr.vmem [resolvable:$true] %s2218
          %s2220 = sshll.u32 %s2216, 4
          %s2221 = int_to_ptr.hbm [resolvable:$true] %s2220
          %2223 = dma.vmem_to_hbm [thread:$0]  %s2219, 128, %s2221, %s2190
        $region56: #{tpu_custom_call.1} parent=35 // pred_fallthru
          _
        // Predicated region
        $region57: #{tpu_custom_call.1} parent=35 // pred_check
          %p2224 = pneg %p188
        $region58: #{tpu_custom_call.1} parent=35 // pred_check_branch
          %2226 = sbr.rel (%p2224) target = $region60
        $region59: #{tpu_custom_call.1} parent=35 // pred_region
          %2228 = vsyncadd %s2195, 0
          %s2229 = smul.addr %s38, 2
          %s2230 = smul.addr %s2229, 8
          %s2231 = scalar_lea.hbm %s5, %s2230
          %s2232 = sshll.u32 %s2198, 4
          %s2233 = int_to_ptr.vmem [resolvable:$true] %s2232
          %s2234 = sshll.u32 %s2231, 4
          %s2235 = int_to_ptr.hbm [resolvable:$true] %s2234
          %2240 = dma.vmem_to_hbm [thread:$0]  %s2233, 256, %s2235, %s2195, 128, 128, 8
        $region60: #{tpu_custom_call.1} parent=35 // pred_fallthru
          _
        // Predicated region
        $region61: #{tpu_custom_call.1} parent=35 // pred_check
          %p2241 = pneg %p214
        $region62: #{tpu_custom_call.1} parent=35 // pred_check_branch
          %2243 = sbr.rel (%p2241) target = $region64
        $region63: #{tpu_custom_call.1} parent=35 // pred_region
          %2245 = vsyncadd %s2200, 0
          %s2246 = smul.addr %s38, 4
          %s2247 = scalar_lea.hbm %s6, %s2246
          %s2249 = sshll.u32 %s2203, 4
          %s2250 = int_to_ptr.vmem [resolvable:$true] %s2249
          %s2251 = sshll.u32 %s2247, 4
          %s2252 = int_to_ptr.hbm [resolvable:$true] %s2251
          %2254 = dma.vmem_to_hbm [thread:$0]  %s2250, 64, %s2252, %s2200
        $region64: #{tpu_custom_call.1} parent=35 // pred_fallthru
          _
        // Predicated region
        $region65: #{tpu_custom_call.1} parent=35 // pred_check
          %p2255 = pneg %p242
        $region66: #{tpu_custom_call.1} parent=35 // pred_check_branch
          %2257 = sbr.rel (%p2255) target = $region68
        $region67: #{tpu_custom_call.1} parent=35 // pred_region
          %2259 = vsyncadd %s2205, 0
          %s2260 = sadd.s32 %s39, %s38
          %s2261 = smul.addr %s2260, 8
          %s2262 = scalar_lea.hbm %s7, %s2261
          %s2264 = sshll.u32 %s2208, 4
          %s2265 = int_to_ptr.vmem [resolvable:$true] %s2264
          %s2266 = sshll.u32 %s2262, 4
          %s2267 = int_to_ptr.hbm [resolvable:$true] %s2266
          %2269 = dma.vmem_to_hbm [thread:$0]  %s2265, 128, %s2267, %s2205
        $region68: #{tpu_custom_call.1} parent=35 // pred_fallthru
          _
      $region36: #{tpu_custom_call.1} parent=5 // pred_fallthru
        _
      %p2270 = scmp.le.s32.totalorder 2, %s29
      // Predicated region
      $region69: #{tpu_custom_call.1} parent=5 // pred_check
        %p2271 = pneg %p2270
      $region70: #{tpu_custom_call.1} parent=5 // pred_check_branch
        %2273 = sbr.rel (%p2271) target = $region72
      $region71: #{tpu_custom_call.1} parent=5 // pred_region
        %s2274 = ssub.s32 %s29, 2
        // Predicated region
        $region73: #{tpu_custom_call.1} parent=71 // pred_check
          %p2275 = pneg %p168
        $region74: #{tpu_custom_call.1} parent=71 // pred_check_branch
          %2277 = sbr.rel (%p2275) target = $region76
        $region75: #{tpu_custom_call.1} parent=71 // pred_region
          %s2278 = sand.u32 %s153, 1
          %s2279 = scalar_lea.sflag [#allocation6], %s2278
          %s2280 = sand.u32 %s153, 1
          %s2281 = smul.addr %s2280, 8
          %s2282 = scalar_lea.vmem [#allocation10], %s2281
          %2284 = dma.done %s2279, 128
        $region76: #{tpu_custom_call.1} parent=71 // pred_fallthru
          _
        // Predicated region
        $region77: #{tpu_custom_call.1} parent=71 // pred_check
          %p2285 = pneg %p194
        $region78: #{tpu_custom_call.1} parent=71 // pred_check_branch
          %2287 = sbr.rel (%p2285) target = $region80
        $region79: #{tpu_custom_call.1} parent=71 // pred_region
          %s2288 = sand.u32 %s35, 1
          %s2289 = scalar_lea.sflag [#allocation12], %s2288
          %s2290 = sand.u32 %s179, 1
          %s2291 = smul.addr %s2290, 16
          %s2292 = scalar_lea.vmem [#allocation11], %s2291
          %2294 = dma.done %s2289, 256
        $region80: #{tpu_custom_call.1} parent=71 // pred_fallthru
          _
        // Predicated region
        $region81: #{tpu_custom_call.1} parent=71 // pred_check
          %p2295 = pneg %p220
        $region82: #{tpu_custom_call.1} parent=71 // pred_check_branch
          %2297 = sbr.rel (%p2295) target = $region84
        $region83: #{tpu_custom_call.1} parent=71 // pred_region
          %s2298 = sand.u32 %s35, 1
          %s2299 = scalar_lea.sflag [#allocation12], %s2298
          %s2300 = sand.u32 %s205, 1
          %s2301 = smul.addr %s2300, 4
          %s2302 = scalar_lea.vmem [#allocation13], %s2301
          %2304 = dma.done %s2299, 64
        $region84: #{tpu_custom_call.1} parent=71 // pred_fallthru
          _
        // Predicated region
        $region85: #{tpu_custom_call.1} parent=71 // pred_check
          %p2305 = pneg %p248
        $region86: #{tpu_custom_call.1} parent=71 // pred_check_branch
          %2307 = sbr.rel (%p2305) target = $region88
        $region87: #{tpu_custom_call.1} parent=71 // pred_region
          %s2308 = sand.u32 %s233, 1
          %s2309 = scalar_lea.sflag [#allocation15], %s2308
          %s2310 = sand.u32 %s233, 1
          %s2311 = smul.addr %s2310, 8
          %s2312 = scalar_lea.vmem [#allocation14], %s2311
          %2314 = dma.done %s2309, 128
        $region88: #{tpu_custom_call.1} parent=71 // pred_fallthru
          _
      $region72: #{tpu_custom_call.1} parent=5 // pred_fallthru
        _
    $region6: #{tpu_custom_call.1} parent=1 // loop_footer
      %s33 = sadd.s32 1, %s29
    $region7: #{tpu_custom_call.1} parent=1 // loop_footer_branch
      %28 = sbr.rel target = $region3
    $region8: #{tpu_custom_call.1} parent=1 // loop_exit
      _
    %2315 = vsyncpa [#allocation5], 1
    %s2316 = scalar_lea.sflag [#allocation5], 1
    %2317 = vsyncpa %s2316, 1
    %2318 = vsyncpa [#allocation8], 1
    %s2319 = scalar_lea.sflag [#allocation8], 1
    %2320 = vsyncpa %s2319, 1
    %2321 = vsyncpa [#allocation6], 1
    %s2322 = scalar_lea.sflag [#allocation6], 1
    %2323 = vsyncpa %s2322, 1
    %2324 = vsyncpa [#allocation12], 1
    %s2325 = scalar_lea.sflag [#allocation12], 1
    %2326 = vsyncpa %s2325, 1
    %2327 = vsyncpa [#allocation15], 1
    %s2328 = scalar_lea.sflag [#allocation15], 1
    %2329 = vsyncpa %s2328, 1

</llo_original>
